<compile_context>
chip_gen: v7x
topology: tpu7x:2x2x1
jax: 0.10.0
libtpu: 0.0.40
codegen_flags: <defaults>
</compile_context>

<pallas_src>
import jax
import jax.numpy as jnp
from jax.experimental import pallas as pl
from jax.experimental.pallas import tpu as pltpu


def _round_up(n, m):
    return ((n + m - 1) // m) * m


def _mlp_kernel(x_ref, w1_ref, b1_ref, w2_ref, b2_ref, w3_ref, b3_ref, o_ref):
    # Layer 0: Linear(input -> 300) + ReLU  (bf16 MXU matmul, f32 accumulate)
    h1 = jnp.dot(x_ref[...], w1_ref[...], preferred_element_type=jnp.float32)
    h1 = jnp.maximum(h1 + b1_ref[...], 0.0)
    # Layer 1: Linear(300 -> 100) + ReLU
    h2 = jnp.dot(h1.astype(jnp.bfloat16), w2_ref[...],
                 preferred_element_type=jnp.float32)
    h2 = jnp.maximum(h2 + b2_ref[...], 0.0)
    # Output head: Linear(100 -> n_cls), no activation
    out = jnp.dot(h2.astype(jnp.bfloat16), w3_ref[...],
                  preferred_element_type=jnp.float32)
    o_ref[...] = (out + b3_ref[...]).astype(o_ref.dtype)


def alternating_noisy_mlp(x, params, *, batch_tile=512):
    """x: [B, C, H, W] (or already [B, D]); params: dict of weights/biases."""
    B = x.shape[0]
    x2d = x.reshape(B, -1).astype(jnp.float32)      # x.view(x.size(0), -1)
    D = x2d.shape[1]

    w1, b1 = params["w1"], params["b1"]
    w2, b2 = params["w2"], params["b2"]
    w3, b3 = params["w3"], params["b3"]
    H1, H2, n_cls = w1.shape[1], w2.shape[1], w3.shape[1]

    # Lane-/MXU-aligned padded feature dims (zero padding is exact here).
    Dp  = _round_up(D, 128)
    H1p = _round_up(H1, 128)
    H2p = _round_up(H2, 128)
    Cp  = _round_up(n_cls, 128)

    # Batch tile: multiple of 16 (bf16 sublane packing); pad B to a tile multiple.
    TM = max(16, min(batch_tile, _round_up(B, 16)))
    Bp = _round_up(B, TM)

    pad2 = lambda a, r, c: jnp.pad(a, ((0, r - a.shape[0]), (0, c - a.shape[1])))

    # bf16 matmul operands; biases stay f32 (VPU add / ReLU in f32).
    xp  = pad2(x2d, Bp, Dp).astype(jnp.bfloat16)
    w1p = pad2(w1, Dp, H1p).astype(jnp.bfloat16)
    w2p = pad2(w2, H1p, H2p).astype(jnp.bfloat16)
    w3p = pad2(w3, H2p, Cp).astype(jnp.bfloat16)
    b1p = pad2(b1, 1, H1p)
    b2p = pad2(b2, 1, H2p)
    b3p = pad2(b3, 1, Cp)

    # Weights/biases: constant index_map -> VMEM-resident across batch tiles.
    resident = lambda a: pl.BlockSpec(a.shape, lambda i: (0,) * a.ndim)

    out_p = pl.pallas_call(
        _mlp_kernel,
        out_shape=jax.ShapeDtypeStruct((Bp, Cp), jnp.float32),
        grid=(Bp // TM,),
        in_specs=[
            pl.BlockSpec((TM, Dp), lambda i: (i, 0)),   # x: pipelined over batch
            resident(w1p), resident(b1p),
            resident(w2p), resident(b2p),
            resident(w3p), resident(b3p),
        ],
        out_specs=pl.BlockSpec((TM, Cp), lambda i: (i, 0)),
        compiler_params=pltpu.CompilerParams(
            dimension_semantics=("parallel",)),
    )(xp, w1p, b1p, w2p, b2p, w3p, b3p)

    return out_p[:B, :n_cls]


def init_params(key, input_dim, n_cls, layer_dims=(300, 100)):
    """Deterministic PyTorch-style init: U(-1/sqrt(fan_in), 1/sqrt(fan_in))."""
    dims = (input_dim,) + tuple(layer_dims) + (n_cls,)
    params = {}
    keys = jax.random.split(key, 2 * (len(dims) - 1))
    for i in range(len(dims) - 1):
        fan_in, fan_out = dims[i], dims[i + 1]
        bound = 1.0 / (fan_in ** 0.5)
        w = jax.random.uniform(keys[2 * i], (fan_in, fan_out),
                               minval=-bound, maxval=bound, dtype=jnp.float32)
        b = jax.random.uniform(keys[2 * i + 1], (1, fan_out),
                               minval=-bound, maxval=bound, dtype=jnp.float32)
        params[f"w{i + 1}"] = w
        params[f"b{i + 1}"] = b
    return params


def reference_mlp_f32(x, params):
    """Pure-JAX f32 reference of the module's forward pass."""
    h = x.reshape(x.shape[0], -1).astype(jnp.float32)
    h = jnp.maximum(h @ params["w1"] + params["b1"], 0.0)
    h = jnp.maximum(h @ params["w2"] + params["b2"], 0.0)
    return h @ params["w3"] + params["b3"]


def reference_mlp_bf16(x, params):
    """Pure-JAX reference with the same bf16-operand / f32-accumulate math."""
    h = x.reshape(x.shape[0], -1).astype(jnp.bfloat16)
    w1 = params["w1"].astype(jnp.bfloat16)
    w2 = params["w2"].astype(jnp.bfloat16)
    w3 = params["w3"].astype(jnp.bfloat16)
    h = jnp.maximum(jnp.dot(h, w1, preferred_element_type=jnp.float32)
                    + params["b1"], 0.0)
    h = jnp.maximum(jnp.dot(h.astype(jnp.bfloat16), w2,
                            preferred_element_type=jnp.float32)
                    + params["b2"], 0.0)
    return (jnp.dot(h.astype(jnp.bfloat16), w3,
                    preferred_element_type=jnp.float32) + params["b3"])


if __name__ == "__main__":
    key = jax.random.PRNGKey(0)
    k_x, k_p = jax.random.split(key)

    B, C, H, W = 2, 4, 16, 16          # input_dim = C*H*W = 1024
    n_cls = 10
    x = jax.random.normal(k_x, (B, C, H, W), dtype=jnp.float32)

    params = init_params(k_p, input_dim=C * H * W, n_cls=n_cls,
                         layer_dims=(300, 100))

    out = alternating_noisy_mlp(x, params)
    out = jax.block_until_ready(out)
    assert out.shape == (B, n_cls), out.shape

    # Exact-math check against a reference using the same bf16/f32 mixed precision.
    ref_bf16 = reference_mlp_bf16(x, params)
    assert jnp.allclose(out, ref_bf16, atol=2e-3, rtol=2e-3), \
        float(jnp.max(jnp.abs(out - ref_bf16)))

    # Sanity check against the full-f32 reference (bf16 rounding tolerance).
    ref_f32 = reference_mlp_f32(x, params)
    assert jnp.allclose(out, ref_f32, atol=5e-2, rtol=5e-2), \
        float(jnp.max(jnp.abs(out - ref_f32)))

    print("KERNEL_OK")
</pallas_src>

<mosaic_0001>
module attributes {stable_mosaic.version = 11 : i64} {
  func.func @_mlp_kernel(%arg0: i32, %arg1: memref<16x1024xbf16, #tpu.memory_space<vmem>>, %arg2: memref<1024x384xbf16, #tpu.memory_space<vmem>>, %arg3: memref<1x384xf32, #tpu.memory_space<vmem>>, %arg4: memref<384x128xbf16, #tpu.memory_space<vmem>>, %arg5: memref<1x128xf32, #tpu.memory_space<vmem>>, %arg6: memref<128x128xbf16, #tpu.memory_space<vmem>>, %arg7: memref<1x128xf32, #tpu.memory_space<vmem>>, %arg8: memref<16x128xf32, #tpu.memory_space<vmem>>) attributes {dimension_semantics = [#tpu.dimension_semantics<parallel>], iteration_bounds = array<i64: 1>, scalar_prefetch = 0 : i64, scratch_operands = 0 : i64, tpu.core_type = #tpu.core_type<tc>, window_params = [{transform_indices = @transform_0, window_bounds = array<i64: 16, 1024>}, {pipeline_mode = #tpu.pipeline_mode<synchronous>, transform_indices = @transform_1, window_bounds = array<i64: 1024, 384>}, {pipeline_mode = #tpu.pipeline_mode<synchronous>, transform_indices = @transform_2, window_bounds = array<i64: 1, 384>}, {pipeline_mode = #tpu.pipeline_mode<synchronous>, transform_indices = @transform_3, window_bounds = array<i64: 384, 128>}, {pipeline_mode = #tpu.pipeline_mode<synchronous>, transform_indices = @transform_4, window_bounds = array<i64: 1, 128>}, {pipeline_mode = #tpu.pipeline_mode<synchronous>, transform_indices = @transform_5, window_bounds = array<i64: 128, 128>}, {pipeline_mode = #tpu.pipeline_mode<synchronous>, transform_indices = @transform_6, window_bounds = array<i64: 1, 128>}, {transform_indices = @transform_7, window_bounds = array<i64: 16, 128>}]} {
    %c0 = arith.constant 0 : index
    %c0_0 = arith.constant 0 : index
    %0 = vector.load %arg1[%c0, %c0_0] : memref<16x1024xbf16, #tpu.memory_space<vmem>>, vector<16x1024xbf16>
    %c0_1 = arith.constant 0 : index
    %c0_2 = arith.constant 0 : index
    %1 = vector.load %arg2[%c0_1, %c0_2] : memref<1024x384xbf16, #tpu.memory_space<vmem>>, vector<1024x384xbf16>
    %cst = arith.constant dense<0.000000e+00> : vector<16x384xf32>
    %2 = tpu.matmul %0, %1, %cst {dimension_numbers = #tpu.dot_dimension_numbers<[1], [0], [0], [1], [0, 0, 1, 1], [], []>} : vector<16x1024xbf16>, vector<1024x384xbf16>, vector<16x384xf32> -> vector<16x384xf32>
    %c0_3 = arith.constant 0 : index
    %c0_4 = arith.constant 0 : index
    %3 = vector.load %arg3[%c0_3, %c0_4] : memref<1x384xf32, #tpu.memory_space<vmem>>, vector<1x384xf32>
    %4 = vector.broadcast %3 : vector<1x384xf32> to vector<16x384xf32>
    %5 = arith.addf %2, %4 : vector<16x384xf32>
    %cst_5 = arith.constant 0.000000e+00 : f32
    %6 = vector.broadcast %cst_5 : f32 to vector<16x384xf32>
    %7 = arith.maximumf %5, %6 : vector<16x384xf32>
    %8 = arith.truncf %7 : vector<16x384xf32> to vector<16x384xbf16>
    %c0_6 = arith.constant 0 : index
    %c0_7 = arith.constant 0 : index
    %9 = vector.load %arg4[%c0_6, %c0_7] : memref<384x128xbf16, #tpu.memory_space<vmem>>, vector<384x128xbf16>
    %cst_8 = arith.constant dense<0.000000e+00> : vector<16x128xf32>
    %10 = tpu.matmul %8, %9, %cst_8 {dimension_numbers = #tpu.dot_dimension_numbers<[1], [0], [0], [1], [0, 0, 1, 1], [], []>} : vector<16x384xbf16>, vector<384x128xbf16>, vector<16x128xf32> -> vector<16x128xf32>
    %c0_9 = arith.constant 0 : index
    %c0_10 = arith.constant 0 : index
    %11 = vector.load %arg5[%c0_9, %c0_10] : memref<1x128xf32, #tpu.memory_space<vmem>>, vector<1x128xf32>
    %12 = vector.broadcast %11 : vector<1x128xf32> to vector<16x128xf32>
    %13 = arith.addf %10, %12 : vector<16x128xf32>
    %cst_11 = arith.constant 0.000000e+00 : f32
    %14 = vector.broadcast %cst_11 : f32 to vector<16x128xf32>
    %15 = arith.maximumf %13, %14 : vector<16x128xf32>
    %16 = arith.truncf %15 : vector<16x128xf32> to vector<16x128xbf16>
    %c0_12 = arith.constant 0 : index
    %c0_13 = arith.constant 0 : index
    %17 = vector.load %arg6[%c0_12, %c0_13] : memref<128x128xbf16, #tpu.memory_space<vmem>>, vector<128x128xbf16>
    %cst_14 = arith.constant dense<0.000000e+00> : vector<16x128xf32>
    %18 = tpu.matmul %16, %17, %cst_14 {dimension_numbers = #tpu.dot_dimension_numbers<[1], [0], [0], [1], [0, 0, 1, 1], [], []>} : vector<16x128xbf16>, vector<128x128xbf16>, vector<16x128xf32> -> vector<16x128xf32>
    %c0_15 = arith.constant 0 : index
    %c0_16 = arith.constant 0 : index
    %19 = vector.load %arg7[%c0_15, %c0_16] : memref<1x128xf32, #tpu.memory_space<vmem>>, vector<1x128xf32>
    %20 = vector.broadcast %19 : vector<1x128xf32> to vector<16x128xf32>
    %21 = arith.addf %18, %20 : vector<16x128xf32>
    %c0_17 = arith.constant 0 : index
    %c0_18 = arith.constant 0 : index
    %22 = vector.load %arg8[%c0_17, %c0_18] : memref<16x128xf32, #tpu.memory_space<vmem>>, vector<16x128xf32>
    tpu.vector_store %arg8[%c0_17, %c0_18], %21 {strides = array<i32>} : memref<16x128xf32, #tpu.memory_space<vmem>>, vector<16x128xf32>,
    return
  }
  func.func @transform_0(%arg0: i32) -> (i32, i32) {
    %c0_i32 = arith.constant 0 : i32
    %c0_i32_0 = arith.constant 0 : i32
    return %arg0, %c0_i32 : i32, i32
  }
  func.func @transform_1(%arg0: i32) -> (i32, i32) {
    %c0_i32 = arith.constant 0 : i32
    %c0_i32_0 = arith.constant 0 : i32
    %c0_i32_1 = arith.constant 0 : i32
    return %c0_i32, %c0_i32_0 : i32, i32
  }
  func.func @transform_2(%arg0: i32) -> (i32, i32) {
    %c0_i32 = arith.constant 0 : i32
    %c0_i32_0 = arith.constant 0 : i32
    %c0_i32_1 = arith.constant 0 : i32
    return %c0_i32, %c0_i32_0 : i32, i32
  }
  func.func @transform_3(%arg0: i32) -> (i32, i32) {
    %c0_i32 = arith.constant 0 : i32
    %c0_i32_0 = arith.constant 0 : i32
    %c0_i32_1 = arith.constant 0 : i32
    return %c0_i32, %c0_i32_0 : i32, i32
  }
  func.func @transform_4(%arg0: i32) -> (i32, i32) {
    %c0_i32 = arith.constant 0 : i32
    %c0_i32_0 = arith.constant 0 : i32
    %c0_i32_1 = arith.constant 0 : i32
    return %c0_i32, %c0_i32_0 : i32, i32
  }
  func.func @transform_5(%arg0: i32) -> (i32, i32) {
    %c0_i32 = arith.constant 0 : i32
    %c0_i32_0 = arith.constant 0 : i32
    %c0_i32_1 = arith.constant 0 : i32
    return %c0_i32, %c0_i32_0 : i32, i32
  }
  func.func @transform_6(%arg0: i32) -> (i32, i32) {
    %c0_i32 = arith.constant 0 : i32
    %c0_i32_0 = arith.constant 0 : i32
    %c0_i32_1 = arith.constant 0 : i32
    return %c0_i32, %c0_i32_0 : i32, i32
  }
  func.func @transform_7(%arg0: i32) -> (i32, i32) {
    %c0_i32 = arith.constant 0 : i32
    %c0_i32_0 = arith.constant 0 : i32
    return %arg0, %c0_i32 : i32, i32
  }
}

</mosaic_0001>

<llo_original>
// kernel: tpu_custom_call.1
$region0: #{tpu_custom_call.1}
  #allocation0 [shape = 'u32[]', space=smem, size = 0x4, offset = 0x4, fixed_abs, tag = 'smem constant byte address 0x4 - core index']
  #allocation1 [shape = 'u32[144,128]{1,0:T(1,128)}', space=vmem, size = 0x12000, scoped, tag = 'internal scratch']
  %s0 = inlined_call_operand.hbm [shape: bf16[16,1024], index: 0, kind: input, shape index: {}]
  %s1 = inlined_call_operand.hbm [shape: bf16[1024,384], index: 1, kind: input, shape index: {}]
  %s2 = inlined_call_operand.vmem [shape: f32[1,384], index: 2, kind: input, shape index: {}]
  %s3 = inlined_call_operand.hbm [shape: bf16[384,128], index: 3, kind: input, shape index: {}]
  %s4 = inlined_call_operand.vmem [shape: f32[1,128], index: 4, kind: input, shape index: {}]
  %s5 = inlined_call_operand.hbm [shape: bf16[128,128], index: 5, kind: input, shape index: {}]
  %s6 = inlined_call_operand.vmem [shape: f32[1,128], index: 6, kind: input, shape index: {}]
  %s7 = inlined_call_operand.hbm [shape: f32[16,128], index: 7, kind: output, shape index: {}]
  %s8 = sld [smem:[#allocation0]]
  $region54: #{tpu_custom_call.1} parent=0
    _
  %s10 = ssub.s32 1, %s8
  %s11 = scalar_select 0, %s10, %s8
  $region1: #{tpu_custom_call.1} parent=0
    #allocation2 [shape = 'u8[32768]{0}', space=vmem, size = 0x8000, scoped, tag = 'input window, operand 0, single buffered']
    #allocation3 [shape = 's32[1]{0}', space=sflag, size = 0x4, scoped, tag = 'scoped memory for tpu_custom_call.1']
    #allocation4 [shape = 's32[1]{0}', space=sflag, size = 0x4, scoped, tag = 'scoped memory for tpu_custom_call.1']
    #allocation5 [shape = 'u8[786432]{0}', space=vmem, size = 0xc0000, scoped, tag = 'input window, operand 1, single buffered']
    #allocation6 [shape = 's32[1]{0}', space=sflag, size = 0x4, scoped, tag = 'scoped memory for tpu_custom_call.1']
    #allocation7 [shape = 'u8[98304]{0}', space=vmem, size = 0x18000, scoped, tag = 'input window, operand 3, single buffered']
    #allocation8 [shape = 'u8[32768]{0}', space=vmem, size = 0x8000, scoped, tag = 'input window, operand 5, single buffered']
    #allocation9 [shape = 's32[1]{0}', space=sflag, size = 0x4, scoped, tag = 'scoped memory for tpu_custom_call.1']
    #allocation10 [shape = 'u8[8192]{0}', space=vmem, size = 0x2000, scoped, tag = 'output window, operand 0, single buffered']
    %12 = vsyncpa [#allocation3], 0
    %13 = vsyncpa [#allocation6], 0
    %14 = vsyncpa [#allocation9], 0
    %15 = vsyncpa [#allocation4], 0
    // Predicated region
    $region2: #{tpu_custom_call.1} parent=1 // pred_check
      _
    $region3: #{tpu_custom_call.1} parent=1 // pred_check_branch
      %17 = sbr.rel (0) target = $region5
    $region4: #{tpu_custom_call.1} parent=1 // pred_region
      %s19 = ssub.s32 1024, 1024
      %20 = vsyncadd [#allocation3], %s19
      %s21 = sshll.u32 [#allocation2], 4
      %s22 = int_to_ptr.vmem [resolvable:$true] %s21
      %27 = dma.hbm_to_vmem [thread:$0]  %s0, 1024, %s22, [#allocation3], 512, 512, 32
    $region5: #{tpu_custom_call.1} parent=1 // pred_fallthru
      _
    // Predicated region
    $region6: #{tpu_custom_call.1} parent=1 // pred_check
      _
    $region7: #{tpu_custom_call.1} parent=1 // pred_check_branch
      %29 = sbr.rel (0) target = $region9
    $region8: #{tpu_custom_call.1} parent=1 // pred_region
      %s31 = ssub.s32 24576, 24576
      %32 = vsyncadd [#allocation6], %s31
      %s33 = sshll.u32 [#allocation5], 4
      %s34 = int_to_ptr.vmem [resolvable:$true] %s33
      %39 = dma.hbm_to_vmem [thread:$0]  %s1, 24576, %s34, [#allocation6], 192, 192, 12
    $region9: #{tpu_custom_call.1} parent=1 // pred_fallthru
      _
    // Predicated region
    $region10: #{tpu_custom_call.1} parent=1 // pred_check
      _
    $region11: #{tpu_custom_call.1} parent=1 // pred_check_branch
      %41 = sbr.rel (0) target = $region13
    $region12: #{tpu_custom_call.1} parent=1 // pred_region
      _
    $region13: #{tpu_custom_call.1} parent=1 // pred_fallthru
      _
    // Predicated region
    $region14: #{tpu_custom_call.1} parent=1 // pred_check
      _
    $region15: #{tpu_custom_call.1} parent=1 // pred_check_branch
      %43 = sbr.rel (0) target = $region17
    $region16: #{tpu_custom_call.1} parent=1 // pred_region
      %s45 = ssub.s32 3072, 3072
      %46 = vsyncadd [#allocation6], %s45
      %s47 = sshll.u32 [#allocation7], 4
      %s48 = int_to_ptr.vmem [resolvable:$true] %s47
      %53 = dma.hbm_to_vmem [thread:$0]  %s3, 3072, %s48, [#allocation6], 64, 64, 4
    $region17: #{tpu_custom_call.1} parent=1 // pred_fallthru
      _
    // Predicated region
    $region18: #{tpu_custom_call.1} parent=1 // pred_check
      _
    $region19: #{tpu_custom_call.1} parent=1 // pred_check_branch
      %55 = sbr.rel (0) target = $region21
    $region20: #{tpu_custom_call.1} parent=1 // pred_region
      _
    $region21: #{tpu_custom_call.1} parent=1 // pred_fallthru
      _
    // Predicated region
    $region22: #{tpu_custom_call.1} parent=1 // pred_check
      _
    $region23: #{tpu_custom_call.1} parent=1 // pred_check_branch
      %57 = sbr.rel (0) target = $region25
    $region24: #{tpu_custom_call.1} parent=1 // pred_region
      %s59 = ssub.s32 1024, 1024
      %60 = vsyncadd [#allocation9], %s59
      %s61 = sshll.u32 [#allocation8], 4
      %s62 = int_to_ptr.vmem [resolvable:$true] %s61
      %67 = dma.hbm_to_vmem [thread:$0]  %s5, 1024, %s62, [#allocation9], 64, 64, 4
    $region25: #{tpu_custom_call.1} parent=1 // pred_fallthru
      _
    // Predicated region
    $region26: #{tpu_custom_call.1} parent=1 // pred_check
      _
    $region27: #{tpu_custom_call.1} parent=1 // pred_check_branch
      %69 = sbr.rel (0) target = $region29
    $region28: #{tpu_custom_call.1} parent=1 // pred_region
      _
    $region29: #{tpu_custom_call.1} parent=1 // pred_fallthru
      _
    // Predicated region
    $region30: #{tpu_custom_call.1} parent=1 // pred_check
      _
    $region31: #{tpu_custom_call.1} parent=1 // pred_check_branch
      %71 = sbr.rel (0) target = $region33
    $region32: #{tpu_custom_call.1} parent=1 // pred_region
      %72 = dma.done [#allocation3], 1024
    $region33: #{tpu_custom_call.1} parent=1 // pred_fallthru
      _
    // Predicated region
    $region34: #{tpu_custom_call.1} parent=1 // pred_check
      _
    $region35: #{tpu_custom_call.1} parent=1 // pred_check_branch
      %74 = sbr.rel (0) target = $region37
    $region36: #{tpu_custom_call.1} parent=1 // pred_region
      %75 = dma.done [#allocation6], 24576
    $region37: #{tpu_custom_call.1} parent=1 // pred_fallthru
      _
    // Predicated region
    $region38: #{tpu_custom_call.1} parent=1 // pred_check
      _
    $region39: #{tpu_custom_call.1} parent=1 // pred_check_branch
      %77 = sbr.rel (0) target = $region41
    $region40: #{tpu_custom_call.1} parent=1 // pred_region
      %78 = dma.done [#allocation6], 3072
    $region41: #{tpu_custom_call.1} parent=1 // pred_fallthru
      _
    // Predicated region
    $region42: #{tpu_custom_call.1} parent=1 // pred_check
      _
    $region43: #{tpu_custom_call.1} parent=1 // pred_check_branch
      %80 = sbr.rel (0) target = $region45
    $region44: #{tpu_custom_call.1} parent=1 // pred_region
      %81 = dma.done [#allocation9], 1024
    $region45: #{tpu_custom_call.1} parent=1 // pred_fallthru
      _
    %v83 = vld [vmem:[#allocation2] sm:$0xff]
    %v84 = vld [vmem:[#allocation2 + $0x8] sm:$0xff]
    %v85 = vld [vmem:[#allocation2 + $0x10] sm:$0xff]
    %v86 = vld [vmem:[#allocation2 + $0x18] sm:$0xff]
    %v87 = vld [vmem:[#allocation2 + $0x20] sm:$0xff]
    %v88 = vld [vmem:[#allocation2 + $0x28] sm:$0xff]
    %v89 = vld [vmem:[#allocation2 + $0x30] sm:$0xff]
    %v90 = vld [vmem:[#allocation2 + $0x38] sm:$0xff]
    %v91 = vld [vmem:[#allocation5] sm:$0xff]
    %v92 = vld [vmem:[#allocation5 + $0x8] sm:$0xf]
    %v93 = vld [vmem:[#allocation5 + $0xc] sm:$0xff]
    %v94 = vld [vmem:[#allocation5 + $0x14] sm:$0xf]
    %v95 = vld [vmem:[#allocation5 + $0x18] sm:$0xff]
    %v96 = vld [vmem:[#allocation5 + $0x20] sm:$0xf]
    %v97 = vld [vmem:[#allocation5 + $0x24] sm:$0xff]
    %v98 = vld [vmem:[#allocation5 + $0x2c] sm:$0xf]
    %v99 = vld [vmem:[#allocation5 + $0x30] sm:$0xff]
    %v100 = vld [vmem:[#allocation5 + $0x38] sm:$0xf]
    %v101 = vld [vmem:[#allocation5 + $0x3c] sm:$0xff]
    %v102 = vld [vmem:[#allocation5 + $0x44] sm:$0xf]
    %v103 = vld [vmem:[#allocation5 + $0x48] sm:$0xff]
    %v104 = vld [vmem:[#allocation5 + $0x50] sm:$0xf]
    %v105 = vld [vmem:[#allocation5 + $0x54] sm:$0xff]
    %v106 = vld [vmem:[#allocation5 + $0x5c] sm:$0xf]
    %v107 = vld [vmem:[#allocation5 + $0x60] sm:$0xff]
    %v108 = vld [vmem:[#allocation5 + $0x68] sm:$0xf]
    %v109 = vld [vmem:[#allocation5 + $0x6c] sm:$0xff]
    %v110 = vld [vmem:[#allocation5 + $0x74] sm:$0xf]
    %v111 = vld [vmem:[#allocation5 + $0x78] sm:$0xff]
    %v112 = vld [vmem:[#allocation5 + $0x80] sm:$0xf]
    %v113 = vld [vmem:[#allocation5 + $0x84] sm:$0xff]
    %v114 = vld [vmem:[#allocation5 + $0x8c] sm:$0xf]
    %v115 = vld [vmem:[#allocation5 + $0x90] sm:$0xff]
    %v116 = vld [vmem:[#allocation5 + $0x98] sm:$0xf]
    %v117 = vld [vmem:[#allocation5 + $0x9c] sm:$0xff]
    %v118 = vld [vmem:[#allocation5 + $0xa4] sm:$0xf]
    %v119 = vld [vmem:[#allocation5 + $0xa8] sm:$0xff]
    %v120 = vld [vmem:[#allocation5 + $0xb0] sm:$0xf]
    %v121 = vld [vmem:[#allocation5 + $0xb4] sm:$0xff]
    %v122 = vld [vmem:[#allocation5 + $0xbc] sm:$0xf]
    %v123 = vld [vmem:[#allocation5 + $0xc0] sm:$0xff]
    %v124 = vld [vmem:[#allocation5 + $0xc8] sm:$0xf]
    %v125 = vld [vmem:[#allocation5 + $0xcc] sm:$0xff]
    %v126 = vld [vmem:[#allocation5 + $0xd4] sm:$0xf]
    %v127 = vld [vmem:[#allocation5 + $0xd8] sm:$0xff]
    %v128 = vld [vmem:[#allocation5 + $0xe0] sm:$0xf]
    %v129 = vld [vmem:[#allocation5 + $0xe4] sm:$0xff]
    %v130 = vld [vmem:[#allocation5 + $0xec] sm:$0xf]
    %v131 = vld [vmem:[#allocation5 + $0xf0] sm:$0xff]
    %v132 = vld [vmem:[#allocation5 + $0xf8] sm:$0xf]
    %v133 = vld [vmem:[#allocation5 + $0xfc] sm:$0xff]
    %v134 = vld [vmem:[#allocation5 + $0x104] sm:$0xf]
    %v135 = vld [vmem:[#allocation5 + $0x108] sm:$0xff]
    %v136 = vld [vmem:[#allocation5 + $0x110] sm:$0xf]
    %v137 = vld [vmem:[#allocation5 + $0x114] sm:$0xff]
    %v138 = vld [vmem:[#allocation5 + $0x11c] sm:$0xf]
    %v139 = vld [vmem:[#allocation5 + $0x120] sm:$0xff]
    %v140 = vld [vmem:[#allocation5 + $0x128] sm:$0xf]
    %v141 = vld [vmem:[#allocation5 + $0x12c] sm:$0xff]
    %v142 = vld [vmem:[#allocation5 + $0x134] sm:$0xf]
    %v143 = vld [vmem:[#allocation5 + $0x138] sm:$0xff]
    %v144 = vld [vmem:[#allocation5 + $0x140] sm:$0xf]
    %v145 = vld [vmem:[#allocation5 + $0x144] sm:$0xff]
    %v146 = vld [vmem:[#allocation5 + $0x14c] sm:$0xf]
    %v147 = vld [vmem:[#allocation5 + $0x150] sm:$0xff]
    %v148 = vld [vmem:[#allocation5 + $0x158] sm:$0xf]
    %v149 = vld [vmem:[#allocation5 + $0x15c] sm:$0xff]
    %v150 = vld [vmem:[#allocation5 + $0x164] sm:$0xf]
    %v151 = vld [vmem:[#allocation5 + $0x168] sm:$0xff]
    %v152 = vld [vmem:[#allocation5 + $0x170] sm:$0xf]
    %v153 = vld [vmem:[#allocation5 + $0x174] sm:$0xff]
    %v154 = vld [vmem:[#allocation5 + $0x17c] sm:$0xf]
    %v155 = vld [vmem:[#allocation5 + $0x180] sm:$0xff]
    %v156 = vld [vmem:[#allocation5 + $0x188] sm:$0xf]
    %v157 = vld [vmem:[#allocation5 + $0x18c] sm:$0xff]
    %v158 = vld [vmem:[#allocation5 + $0x194] sm:$0xf]
    %v159 = vld [vmem:[#allocation5 + $0x198] sm:$0xff]
    %v160 = vld [vmem:[#allocation5 + $0x1a0] sm:$0xf]
    %v161 = vld [vmem:[#allocation5 + $0x1a4] sm:$0xff]
    %v162 = vld [vmem:[#allocation5 + $0x1ac] sm:$0xf]
    %v163 = vld [vmem:[#allocation5 + $0x1b0] sm:$0xff]
    %v164 = vld [vmem:[#allocation5 + $0x1b8] sm:$0xf]
    %v165 = vld [vmem:[#allocation5 + $0x1bc] sm:$0xff]
    %v166 = vld [vmem:[#allocation5 + $0x1c4] sm:$0xf]
    %v167 = vld [vmem:[#allocation5 + $0x1c8] sm:$0xff]
    %v168 = vld [vmem:[#allocation5 + $0x1d0] sm:$0xf]
    %v169 = vld [vmem:[#allocation5 + $0x1d4] sm:$0xff]
    %v170 = vld [vmem:[#allocation5 + $0x1dc] sm:$0xf]
    %v171 = vld [vmem:[#allocation5 + $0x1e0] sm:$0xff]
    %v172 = vld [vmem:[#allocation5 + $0x1e8] sm:$0xf]
    %v173 = vld [vmem:[#allocation5 + $0x1ec] sm:$0xff]
    %v174 = vld [vmem:[#allocation5 + $0x1f4] sm:$0xf]
    %v175 = vld [vmem:[#allocation5 + $0x1f8] sm:$0xff]
    %v176 = vld [vmem:[#allocation5 + $0x200] sm:$0xf]
    %v177 = vld [vmem:[#allocation5 + $0x204] sm:$0xff]
    %v178 = vld [vmem:[#allocation5 + $0x20c] sm:$0xf]
    %v179 = vld [vmem:[#allocation5 + $0x210] sm:$0xff]
    %v180 = vld [vmem:[#allocation5 + $0x218] sm:$0xf]
    %v181 = vld [vmem:[#allocation5 + $0x21c] sm:$0xff]
    %v182 = vld [vmem:[#allocation5 + $0x224] sm:$0xf]
    %v183 = vld [vmem:[#allocation5 + $0x228] sm:$0xff]
    %v184 = vld [vmem:[#allocation5 + $0x230] sm:$0xf]
    %v185 = vld [vmem:[#allocation5 + $0x234] sm:$0xff]
    %v186 = vld [vmem:[#allocation5 + $0x23c] sm:$0xf]
    %v187 = vld [vmem:[#allocation5 + $0x240] sm:$0xff]
    %v188 = vld [vmem:[#allocation5 + $0x248] sm:$0xf]
    %v189 = vld [vmem:[#allocation5 + $0x24c] sm:$0xff]
    %v190 = vld [vmem:[#allocation5 + $0x254] sm:$0xf]
    %v191 = vld [vmem:[#allocation5 + $0x258] sm:$0xff]
    %v192 = vld [vmem:[#allocation5 + $0x260] sm:$0xf]
    %v193 = vld [vmem:[#allocation5 + $0x264] sm:$0xff]
    %v194 = vld [vmem:[#allocation5 + $0x26c] sm:$0xf]
    %v195 = vld [vmem:[#allocation5 + $0x270] sm:$0xff]
    %v196 = vld [vmem:[#allocation5 + $0x278] sm:$0xf]
    %v197 = vld [vmem:[#allocation5 + $0x27c] sm:$0xff]
    %v198 = vld [vmem:[#allocation5 + $0x284] sm:$0xf]
    %v199 = vld [vmem:[#allocation5 + $0x288] sm:$0xff]
    %v200 = vld [vmem:[#allocation5 + $0x290] sm:$0xf]
    %v201 = vld [vmem:[#allocation5 + $0x294] sm:$0xff]
    %v202 = vld [vmem:[#allocation5 + $0x29c] sm:$0xf]
    %v203 = vld [vmem:[#allocation5 + $0x2a0] sm:$0xff]
    %v204 = vld [vmem:[#allocation5 + $0x2a8] sm:$0xf]
    %v205 = vld [vmem:[#allocation5 + $0x2ac] sm:$0xff]
    %v206 = vld [vmem:[#allocation5 + $0x2b4] sm:$0xf]
    %v207 = vld [vmem:[#allocation5 + $0x2b8] sm:$0xff]
    %v208 = vld [vmem:[#allocation5 + $0x2c0] sm:$0xf]
    %v209 = vld [vmem:[#allocation5 + $0x2c4] sm:$0xff]
    %v210 = vld [vmem:[#allocation5 + $0x2cc] sm:$0xf]
    %v211 = vld [vmem:[#allocation5 + $0x2d0] sm:$0xff]
    %v212 = vld [vmem:[#allocation5 + $0x2d8] sm:$0xf]
    %v213 = vld [vmem:[#allocation5 + $0x2dc] sm:$0xff]
    %v214 = vld [vmem:[#allocation5 + $0x2e4] sm:$0xf]
    %v215 = vld [vmem:[#allocation5 + $0x2e8] sm:$0xff]
    %v216 = vld [vmem:[#allocation5 + $0x2f0] sm:$0xf]
    %v217 = vld [vmem:[#allocation5 + $0x2f4] sm:$0xff]
    %v218 = vld [vmem:[#allocation5 + $0x2fc] sm:$0xf]
    %v219 = vld [vmem:[#allocation5 + $0x300] sm:$0xff]
    %v220 = vld [vmem:[#allocation5 + $0x308] sm:$0xf]
    %v221 = vld [vmem:[#allocation5 + $0x30c] sm:$0xff]
    %v222 = vld [vmem:[#allocation5 + $0x314] sm:$0xf]
    %v223 = vld [vmem:[#allocation5 + $0x318] sm:$0xff]
    %v224 = vld [vmem:[#allocation5 + $0x320] sm:$0xf]
    %v225 = vld [vmem:[#allocation5 + $0x324] sm:$0xff]
    %v226 = vld [vmem:[#allocation5 + $0x32c] sm:$0xf]
    %v227 = vld [vmem:[#allocation5 + $0x330] sm:$0xff]
    %v228 = vld [vmem:[#allocation5 + $0x338] sm:$0xf]
    %v229 = vld [vmem:[#allocation5 + $0x33c] sm:$0xff]
    %v230 = vld [vmem:[#allocation5 + $0x344] sm:$0xf]
    %v231 = vld [vmem:[#allocation5 + $0x348] sm:$0xff]
    %v232 = vld [vmem:[#allocation5 + $0x350] sm:$0xf]
    %v233 = vld [vmem:[#allocation5 + $0x354] sm:$0xff]
    %v234 = vld [vmem:[#allocation5 + $0x35c] sm:$0xf]
    %v235 = vld [vmem:[#allocation5 + $0x360] sm:$0xff]
    %v236 = vld [vmem:[#allocation5 + $0x368] sm:$0xf]
    %v237 = vld [vmem:[#allocation5 + $0x36c] sm:$0xff]
    %v238 = vld [vmem:[#allocation5 + $0x374] sm:$0xf]
    %v239 = vld [vmem:[#allocation5 + $0x378] sm:$0xff]
    %v240 = vld [vmem:[#allocation5 + $0x380] sm:$0xf]
    %v241 = vld [vmem:[#allocation5 + $0x384] sm:$0xff]
    %v242 = vld [vmem:[#allocation5 + $0x38c] sm:$0xf]
    %v243 = vld [vmem:[#allocation5 + $0x390] sm:$0xff]
    %v244 = vld [vmem:[#allocation5 + $0x398] sm:$0xf]
    %v245 = vld [vmem:[#allocation5 + $0x39c] sm:$0xff]
    %v246 = vld [vmem:[#allocation5 + $0x3a4] sm:$0xf]
    %v247 = vld [vmem:[#allocation5 + $0x3a8] sm:$0xff]
    %v248 = vld [vmem:[#allocation5 + $0x3b0] sm:$0xf]
    %v249 = vld [vmem:[#allocation5 + $0x3b4] sm:$0xff]
    %v250 = vld [vmem:[#allocation5 + $0x3bc] sm:$0xf]
    %v251 = vld [vmem:[#allocation5 + $0x3c0] sm:$0xff]
    %v252 = vld [vmem:[#allocation5 + $0x3c8] sm:$0xf]
    %v253 = vld [vmem:[#allocation5 + $0x3cc] sm:$0xff]
    %v254 = vld [vmem:[#allocation5 + $0x3d4] sm:$0xf]
    %v255 = vld [vmem:[#allocation5 + $0x3d8] sm:$0xff]
    %v256 = vld [vmem:[#allocation5 + $0x3e0] sm:$0xf]
    %v257 = vld [vmem:[#allocation5 + $0x3e4] sm:$0xff]
    %v258 = vld [vmem:[#allocation5 + $0x3ec] sm:$0xf]
    %v259 = vld [vmem:[#allocation5 + $0x3f0] sm:$0xff]
    %v260 = vld [vmem:[#allocation5 + $0x3f8] sm:$0xf]
    %v261 = vld [vmem:[#allocation5 + $0x3fc] sm:$0xff]
    %v262 = vld [vmem:[#allocation5 + $0x404] sm:$0xf]
    %v263 = vld [vmem:[#allocation5 + $0x408] sm:$0xff]
    %v264 = vld [vmem:[#allocation5 + $0x410] sm:$0xf]
    %v265 = vld [vmem:[#allocation5 + $0x414] sm:$0xff]
    %v266 = vld [vmem:[#allocation5 + $0x41c] sm:$0xf]
    %v267 = vld [vmem:[#allocation5 + $0x420] sm:$0xff]
    %v268 = vld [vmem:[#allocation5 + $0x428] sm:$0xf]
    %v269 = vld [vmem:[#allocation5 + $0x42c] sm:$0xff]
    %v270 = vld [vmem:[#allocation5 + $0x434] sm:$0xf]
    %v271 = vld [vmem:[#allocation5 + $0x438] sm:$0xff]
    %v272 = vld [vmem:[#allocation5 + $0x440] sm:$0xf]
    %v273 = vld [vmem:[#allocation5 + $0x444] sm:$0xff]
    %v274 = vld [vmem:[#allocation5 + $0x44c] sm:$0xf]
    %v275 = vld [vmem:[#allocation5 + $0x450] sm:$0xff]
    %v276 = vld [vmem:[#allocation5 + $0x458] sm:$0xf]
    %v277 = vld [vmem:[#allocation5 + $0x45c] sm:$0xff]
    %v278 = vld [vmem:[#allocation5 + $0x464] sm:$0xf]
    %v279 = vld [vmem:[#allocation5 + $0x468] sm:$0xff]
    %v280 = vld [vmem:[#allocation5 + $0x470] sm:$0xf]
    %v281 = vld [vmem:[#allocation5 + $0x474] sm:$0xff]
    %v282 = vld [vmem:[#allocation5 + $0x47c] sm:$0xf]
    %v283 = vld [vmem:[#allocation5 + $0x480] sm:$0xff]
    %v284 = vld [vmem:[#allocation5 + $0x488] sm:$0xf]
    %v285 = vld [vmem:[#allocation5 + $0x48c] sm:$0xff]
    %v286 = vld [vmem:[#allocation5 + $0x494] sm:$0xf]
    %v287 = vld [vmem:[#allocation5 + $0x498] sm:$0xff]
    %v288 = vld [vmem:[#allocation5 + $0x4a0] sm:$0xf]
    %v289 = vld [vmem:[#allocation5 + $0x4a4] sm:$0xff]
    %v290 = vld [vmem:[#allocation5 + $0x4ac] sm:$0xf]
    %v291 = vld [vmem:[#allocation5 + $0x4b0] sm:$0xff]
    %v292 = vld [vmem:[#allocation5 + $0x4b8] sm:$0xf]
    %v293 = vld [vmem:[#allocation5 + $0x4bc] sm:$0xff]
    %v294 = vld [vmem:[#allocation5 + $0x4c4] sm:$0xf]
    %v295 = vld [vmem:[#allocation5 + $0x4c8] sm:$0xff]
    %v296 = vld [vmem:[#allocation5 + $0x4d0] sm:$0xf]
    %v297 = vld [vmem:[#allocation5 + $0x4d4] sm:$0xff]
    %v298 = vld [vmem:[#allocation5 + $0x4dc] sm:$0xf]
    %v299 = vld [vmem:[#allocation5 + $0x4e0] sm:$0xff]
    %v300 = vld [vmem:[#allocation5 + $0x4e8] sm:$0xf]
    %v301 = vld [vmem:[#allocation5 + $0x4ec] sm:$0xff]
    %v302 = vld [vmem:[#allocation5 + $0x4f4] sm:$0xf]
    %v303 = vld [vmem:[#allocation5 + $0x4f8] sm:$0xff]
    %v304 = vld [vmem:[#allocation5 + $0x500] sm:$0xf]
    %v305 = vld [vmem:[#allocation5 + $0x504] sm:$0xff]
    %v306 = vld [vmem:[#allocation5 + $0x50c] sm:$0xf]
    %v307 = vld [vmem:[#allocation5 + $0x510] sm:$0xff]
    %v308 = vld [vmem:[#allocation5 + $0x518] sm:$0xf]
    %v309 = vld [vmem:[#allocation5 + $0x51c] sm:$0xff]
    %v310 = vld [vmem:[#allocation5 + $0x524] sm:$0xf]
    %v311 = vld [vmem:[#allocation5 + $0x528] sm:$0xff]
    %v312 = vld [vmem:[#allocation5 + $0x530] sm:$0xf]
    %v313 = vld [vmem:[#allocation5 + $0x534] sm:$0xff]
    %v314 = vld [vmem:[#allocation5 + $0x53c] sm:$0xf]
    %v315 = vld [vmem:[#allocation5 + $0x540] sm:$0xff]
    %v316 = vld [vmem:[#allocation5 + $0x548] sm:$0xf]
    %v317 = vld [vmem:[#allocation5 + $0x54c] sm:$0xff]
    %v318 = vld [vmem:[#allocation5 + $0x554] sm:$0xf]
    %v319 = vld [vmem:[#allocation5 + $0x558] sm:$0xff]
    %v320 = vld [vmem:[#allocation5 + $0x560] sm:$0xf]
    %v321 = vld [vmem:[#allocation5 + $0x564] sm:$0xff]
    %v322 = vld [vmem:[#allocation5 + $0x56c] sm:$0xf]
    %v323 = vld [vmem:[#allocation5 + $0x570] sm:$0xff]
    %v324 = vld [vmem:[#allocation5 + $0x578] sm:$0xf]
    %v325 = vld [vmem:[#allocation5 + $0x57c] sm:$0xff]
    %v326 = vld [vmem:[#allocation5 + $0x584] sm:$0xf]
    %v327 = vld [vmem:[#allocation5 + $0x588] sm:$0xff]
    %v328 = vld [vmem:[#allocation5 + $0x590] sm:$0xf]
    %v329 = vld [vmem:[#allocation5 + $0x594] sm:$0xff]
    %v330 = vld [vmem:[#allocation5 + $0x59c] sm:$0xf]
    %v331 = vld [vmem:[#allocation5 + $0x5a0] sm:$0xff]
    %v332 = vld [vmem:[#allocation5 + $0x5a8] sm:$0xf]
    %v333 = vld [vmem:[#allocation5 + $0x5ac] sm:$0xff]
    %v334 = vld [vmem:[#allocation5 + $0x5b4] sm:$0xf]
    %v335 = vld [vmem:[#allocation5 + $0x5b8] sm:$0xff]
    %v336 = vld [vmem:[#allocation5 + $0x5c0] sm:$0xf]
    %v337 = vld [vmem:[#allocation5 + $0x5c4] sm:$0xff]
    %v338 = vld [vmem:[#allocation5 + $0x5cc] sm:$0xf]
    %v339 = vld [vmem:[#allocation5 + $0x5d0] sm:$0xff]
    %v340 = vld [vmem:[#allocation5 + $0x5d8] sm:$0xf]
    %v341 = vld [vmem:[#allocation5 + $0x5dc] sm:$0xff]
    %v342 = vld [vmem:[#allocation5 + $0x5e4] sm:$0xf]
    %v343 = vld [vmem:[#allocation5 + $0x5e8] sm:$0xff]
    %v344 = vld [vmem:[#allocation5 + $0x5f0] sm:$0xf]
    %v345 = vld [vmem:[#allocation5 + $0x5f4] sm:$0xff]
    %v346 = vld [vmem:[#allocation5 + $0x5fc] sm:$0xf]
    %v347 = vld [vmem:[%s2] sm:$0x7]
    %v349 = vlaneseq
    %v350 = vshrl.u32 %v349, 7
    %v351 = vsub.s32 0, %v350
    %v352 = vrot.slane %v347, %v351
    %v353 = vlaneseq
    %v354 = vshrl.u32 %v353, 7
    %v355 = vsub.s32 1, %v354
    %v356 = vrot.slane %v347, %v355
    %v357 = vlaneseq
    %v358 = vshrl.u32 %v357, 7
    %v359 = vsub.s32 2, %v358
    %v360 = vrot.slane %v347, %v359
    %v372 = vunpack.c.l.b16 %v83
    %v373 = vunpack.c.h.b16 %v83
    %v374 = vunpack.c.l.b16 %v84
    %v375 = vunpack.c.h.b16 %v84
    %v376 = vunpack.c.l.b16 %v85
    %v377 = vunpack.c.h.b16 %v85
    %v378 = vunpack.c.l.b16 %v86
    %v379 = vunpack.c.h.b16 %v86
    %v380 = vunpack.c.l.b16 %v87
    %v381 = vunpack.c.h.b16 %v87
    %v382 = vunpack.c.l.b16 %v88
    %v383 = vunpack.c.h.b16 %v88
    %v384 = vunpack.c.l.b16 %v89
    %v385 = vunpack.c.h.b16 %v89
    %v386 = vunpack.c.l.b16 %v90
    %v387 = vunpack.c.h.b16 %v90
    %v388 = vpack.c.b16 %v380, %v372
    %v389 = vpack.c.b16 %v381, %v373
    %v390 = vpack.c.b16 %v382, %v374
    %v391 = vpack.c.b16 %v383, %v375
    %v392 = vpack.c.b16 %v384, %v376
    %v393 = vpack.c.b16 %v385, %v377
    %v394 = vpack.c.b16 %v386, %v378
    %v395 = vpack.c.b16 %v387, %v379
    %v660 = vunpack.c.l.b16 %v91
    %v661 = vunpack.c.h.b16 %v91
    %v662 = vunpack.c.l.b16 %v92
    %v663 = vunpack.c.l.b16 %v93
    %v664 = vunpack.c.h.b16 %v93
    %v665 = vunpack.c.l.b16 %v94
    %v666 = vunpack.c.l.b16 %v95
    %v667 = vunpack.c.h.b16 %v95
    %v668 = vunpack.c.l.b16 %v96
    %v669 = vunpack.c.l.b16 %v97
    %v670 = vunpack.c.h.b16 %v97
    %v671 = vunpack.c.l.b16 %v98
    %v672 = vunpack.c.l.b16 %v99
    %v673 = vunpack.c.h.b16 %v99
    %v674 = vunpack.c.l.b16 %v100
    %v675 = vunpack.c.l.b16 %v101
    %v676 = vunpack.c.h.b16 %v101
    %v677 = vunpack.c.l.b16 %v102
    %v678 = vunpack.c.l.b16 %v103
    %v679 = vunpack.c.h.b16 %v103
    %v680 = vunpack.c.l.b16 %v104
    %v681 = vunpack.c.l.b16 %v105
    %v682 = vunpack.c.h.b16 %v105
    %v683 = vunpack.c.l.b16 %v106
    %v684 = vunpack.c.l.b16 %v107
    %v685 = vunpack.c.h.b16 %v107
    %v686 = vunpack.c.l.b16 %v108
    %v687 = vunpack.c.l.b16 %v109
    %v688 = vunpack.c.h.b16 %v109
    %v689 = vunpack.c.l.b16 %v110
    %v690 = vunpack.c.l.b16 %v111
    %v691 = vunpack.c.h.b16 %v111
    %v692 = vunpack.c.l.b16 %v112
    %v693 = vunpack.c.l.b16 %v113
    %v694 = vunpack.c.h.b16 %v113
    %v695 = vunpack.c.l.b16 %v114
    %v696 = vunpack.c.l.b16 %v115
    %v697 = vunpack.c.h.b16 %v115
    %v698 = vunpack.c.l.b16 %v116
    %v699 = vunpack.c.l.b16 %v117
    %v700 = vunpack.c.h.b16 %v117
    %v701 = vunpack.c.l.b16 %v118
    %v702 = vunpack.c.l.b16 %v119
    %v703 = vunpack.c.h.b16 %v119
    %v704 = vunpack.c.l.b16 %v120
    %v705 = vunpack.c.l.b16 %v121
    %v706 = vunpack.c.h.b16 %v121
    %v707 = vunpack.c.l.b16 %v122
    %v708 = vunpack.c.l.b16 %v123
    %v709 = vunpack.c.h.b16 %v123
    %v710 = vunpack.c.l.b16 %v124
    %v711 = vunpack.c.l.b16 %v125
    %v712 = vunpack.c.h.b16 %v125
    %v713 = vunpack.c.l.b16 %v126
    %v714 = vunpack.c.l.b16 %v127
    %v715 = vunpack.c.h.b16 %v127
    %v716 = vunpack.c.l.b16 %v128
    %v717 = vunpack.c.l.b16 %v129
    %v718 = vunpack.c.h.b16 %v129
    %v719 = vunpack.c.l.b16 %v130
    %v720 = vunpack.c.l.b16 %v131
    %v721 = vunpack.c.h.b16 %v131
    %v722 = vunpack.c.l.b16 %v132
    %v723 = vunpack.c.l.b16 %v133
    %v724 = vunpack.c.h.b16 %v133
    %v725 = vunpack.c.l.b16 %v134
    %v726 = vunpack.c.l.b16 %v135
    %v727 = vunpack.c.h.b16 %v135
    %v728 = vunpack.c.l.b16 %v136
    %v729 = vunpack.c.l.b16 %v137
    %v730 = vunpack.c.h.b16 %v137
    %v731 = vunpack.c.l.b16 %v138
    %v732 = vunpack.c.l.b16 %v139
    %v733 = vunpack.c.h.b16 %v139
    %v734 = vunpack.c.l.b16 %v140
    %v735 = vunpack.c.l.b16 %v141
    %v736 = vunpack.c.h.b16 %v141
    %v737 = vunpack.c.l.b16 %v142
    %v738 = vunpack.c.l.b16 %v143
    %v739 = vunpack.c.h.b16 %v143
    %v740 = vunpack.c.l.b16 %v144
    %v741 = vunpack.c.l.b16 %v145
    %v742 = vunpack.c.h.b16 %v145
    %v743 = vunpack.c.l.b16 %v146
    %v744 = vunpack.c.l.b16 %v147
    %v745 = vunpack.c.h.b16 %v147
    %v746 = vunpack.c.l.b16 %v148
    %v747 = vunpack.c.l.b16 %v149
    %v748 = vunpack.c.h.b16 %v149
    %v749 = vunpack.c.l.b16 %v150
    %v750 = vunpack.c.l.b16 %v151
    %v751 = vunpack.c.h.b16 %v151
    %v752 = vunpack.c.l.b16 %v152
    %v753 = vunpack.c.l.b16 %v153
    %v754 = vunpack.c.h.b16 %v153
    %v755 = vunpack.c.l.b16 %v154
    %v756 = vunpack.c.l.b16 %v155
    %v757 = vunpack.c.h.b16 %v155
    %v758 = vunpack.c.l.b16 %v156
    %v759 = vunpack.c.l.b16 %v157
    %v760 = vunpack.c.h.b16 %v157
    %v761 = vunpack.c.l.b16 %v158
    %v762 = vunpack.c.l.b16 %v159
    %v763 = vunpack.c.h.b16 %v159
    %v764 = vunpack.c.l.b16 %v160
    %v765 = vunpack.c.l.b16 %v161
    %v766 = vunpack.c.h.b16 %v161
    %v767 = vunpack.c.l.b16 %v162
    %v768 = vunpack.c.l.b16 %v163
    %v769 = vunpack.c.h.b16 %v163
    %v770 = vunpack.c.l.b16 %v164
    %v771 = vunpack.c.l.b16 %v165
    %v772 = vunpack.c.h.b16 %v165
    %v773 = vunpack.c.l.b16 %v166
    %v774 = vunpack.c.l.b16 %v167
    %v775 = vunpack.c.h.b16 %v167
    %v776 = vunpack.c.l.b16 %v168
    %v777 = vunpack.c.l.b16 %v169
    %v778 = vunpack.c.h.b16 %v169
    %v779 = vunpack.c.l.b16 %v170
    %v780 = vunpack.c.l.b16 %v171
    %v781 = vunpack.c.h.b16 %v171
    %v782 = vunpack.c.l.b16 %v172
    %v783 = vunpack.c.l.b16 %v173
    %v784 = vunpack.c.h.b16 %v173
    %v785 = vunpack.c.l.b16 %v174
    %v786 = vunpack.c.l.b16 %v175
    %v787 = vunpack.c.h.b16 %v175
    %v788 = vunpack.c.l.b16 %v176
    %v789 = vunpack.c.l.b16 %v177
    %v790 = vunpack.c.h.b16 %v177
    %v791 = vunpack.c.l.b16 %v178
    %v792 = vunpack.c.l.b16 %v179
    %v793 = vunpack.c.h.b16 %v179
    %v794 = vunpack.c.l.b16 %v180
    %v795 = vunpack.c.l.b16 %v181
    %v796 = vunpack.c.h.b16 %v181
    %v797 = vunpack.c.l.b16 %v182
    %v798 = vunpack.c.l.b16 %v183
    %v799 = vunpack.c.h.b16 %v183
    %v800 = vunpack.c.l.b16 %v184
    %v801 = vunpack.c.l.b16 %v185
    %v802 = vunpack.c.h.b16 %v185
    %v803 = vunpack.c.l.b16 %v186
    %v804 = vunpack.c.l.b16 %v187
    %v805 = vunpack.c.h.b16 %v187
    %v806 = vunpack.c.l.b16 %v188
    %v807 = vunpack.c.l.b16 %v189
    %v808 = vunpack.c.h.b16 %v189
    %v809 = vunpack.c.l.b16 %v190
    %v810 = vunpack.c.l.b16 %v191
    %v811 = vunpack.c.h.b16 %v191
    %v812 = vunpack.c.l.b16 %v192
    %v813 = vunpack.c.l.b16 %v193
    %v814 = vunpack.c.h.b16 %v193
    %v815 = vunpack.c.l.b16 %v194
    %v816 = vunpack.c.l.b16 %v195
    %v817 = vunpack.c.h.b16 %v195
    %v818 = vunpack.c.l.b16 %v196
    %v819 = vunpack.c.l.b16 %v197
    %v820 = vunpack.c.h.b16 %v197
    %v821 = vunpack.c.l.b16 %v198
    %v822 = vunpack.c.l.b16 %v199
    %v823 = vunpack.c.h.b16 %v199
    %v824 = vunpack.c.l.b16 %v200
    %v825 = vunpack.c.l.b16 %v201
    %v826 = vunpack.c.h.b16 %v201
    %v827 = vunpack.c.l.b16 %v202
    %v828 = vunpack.c.l.b16 %v203
    %v829 = vunpack.c.h.b16 %v203
    %v830 = vunpack.c.l.b16 %v204
    %v831 = vunpack.c.l.b16 %v205
    %v832 = vunpack.c.h.b16 %v205
    %v833 = vunpack.c.l.b16 %v206
    %v834 = vunpack.c.l.b16 %v207
    %v835 = vunpack.c.h.b16 %v207
    %v836 = vunpack.c.l.b16 %v208
    %v837 = vunpack.c.l.b16 %v209
    %v838 = vunpack.c.h.b16 %v209
    %v839 = vunpack.c.l.b16 %v210
    %v840 = vunpack.c.l.b16 %v211
    %v841 = vunpack.c.h.b16 %v211
    %v842 = vunpack.c.l.b16 %v212
    %v843 = vunpack.c.l.b16 %v213
    %v844 = vunpack.c.h.b16 %v213
    %v845 = vunpack.c.l.b16 %v214
    %v846 = vunpack.c.l.b16 %v215
    %v847 = vunpack.c.h.b16 %v215
    %v848 = vunpack.c.l.b16 %v216
    %v849 = vunpack.c.l.b16 %v217
    %v850 = vunpack.c.h.b16 %v217
    %v851 = vunpack.c.l.b16 %v218
    %v852 = vunpack.c.l.b16 %v219
    %v853 = vunpack.c.h.b16 %v219
    %v854 = vunpack.c.l.b16 %v220
    %v855 = vunpack.c.l.b16 %v221
    %v856 = vunpack.c.h.b16 %v221
    %v857 = vunpack.c.l.b16 %v222
    %v858 = vunpack.c.l.b16 %v223
    %v859 = vunpack.c.h.b16 %v223
    %v860 = vunpack.c.l.b16 %v224
    %v861 = vunpack.c.l.b16 %v225
    %v862 = vunpack.c.h.b16 %v225
    %v863 = vunpack.c.l.b16 %v226
    %v864 = vunpack.c.l.b16 %v227
    %v865 = vunpack.c.h.b16 %v227
    %v866 = vunpack.c.l.b16 %v228
    %v867 = vunpack.c.l.b16 %v229
    %v868 = vunpack.c.h.b16 %v229
    %v869 = vunpack.c.l.b16 %v230
    %v870 = vunpack.c.l.b16 %v231
    %v871 = vunpack.c.h.b16 %v231
    %v872 = vunpack.c.l.b16 %v232
    %v873 = vunpack.c.l.b16 %v233
    %v874 = vunpack.c.h.b16 %v233
    %v875 = vunpack.c.l.b16 %v234
    %v876 = vunpack.c.l.b16 %v235
    %v877 = vunpack.c.h.b16 %v235
    %v878 = vunpack.c.l.b16 %v236
    %v879 = vunpack.c.l.b16 %v237
    %v880 = vunpack.c.h.b16 %v237
    %v881 = vunpack.c.l.b16 %v238
    %v882 = vunpack.c.l.b16 %v239
    %v883 = vunpack.c.h.b16 %v239
    %v884 = vunpack.c.l.b16 %v240
    %v885 = vunpack.c.l.b16 %v241
    %v886 = vunpack.c.h.b16 %v241
    %v887 = vunpack.c.l.b16 %v242
    %v888 = vunpack.c.l.b16 %v243
    %v889 = vunpack.c.h.b16 %v243
    %v890 = vunpack.c.l.b16 %v244
    %v891 = vunpack.c.l.b16 %v245
    %v892 = vunpack.c.h.b16 %v245
    %v893 = vunpack.c.l.b16 %v246
    %v894 = vunpack.c.l.b16 %v247
    %v895 = vunpack.c.h.b16 %v247
    %v896 = vunpack.c.l.b16 %v248
    %v897 = vunpack.c.l.b16 %v249
    %v898 = vunpack.c.h.b16 %v249
    %v899 = vunpack.c.l.b16 %v250
    %v900 = vunpack.c.l.b16 %v251
    %v901 = vunpack.c.h.b16 %v251
    %v902 = vunpack.c.l.b16 %v252
    %v903 = vunpack.c.l.b16 %v253
    %v904 = vunpack.c.h.b16 %v253
    %v905 = vunpack.c.l.b16 %v254
    %v906 = vunpack.c.l.b16 %v255
    %v907 = vunpack.c.h.b16 %v255
    %v908 = vunpack.c.l.b16 %v256
    %v909 = vunpack.c.l.b16 %v257
    %v910 = vunpack.c.h.b16 %v257
    %v911 = vunpack.c.l.b16 %v258
    %v912 = vunpack.c.l.b16 %v259
    %v913 = vunpack.c.h.b16 %v259
    %v914 = vunpack.c.l.b16 %v260
    %v915 = vunpack.c.l.b16 %v261
    %v916 = vunpack.c.h.b16 %v261
    %v917 = vunpack.c.l.b16 %v262
    %v918 = vunpack.c.l.b16 %v263
    %v919 = vunpack.c.h.b16 %v263
    %v920 = vunpack.c.l.b16 %v264
    %v921 = vunpack.c.l.b16 %v265
    %v922 = vunpack.c.h.b16 %v265
    %v923 = vunpack.c.l.b16 %v266
    %v924 = vunpack.c.l.b16 %v267
    %v925 = vunpack.c.h.b16 %v267
    %v926 = vunpack.c.l.b16 %v268
    %v927 = vunpack.c.l.b16 %v269
    %v928 = vunpack.c.h.b16 %v269
    %v929 = vunpack.c.l.b16 %v270
    %v930 = vunpack.c.l.b16 %v271
    %v931 = vunpack.c.h.b16 %v271
    %v932 = vunpack.c.l.b16 %v272
    %v933 = vunpack.c.l.b16 %v273
    %v934 = vunpack.c.h.b16 %v273
    %v935 = vunpack.c.l.b16 %v274
    %v936 = vunpack.c.l.b16 %v275
    %v937 = vunpack.c.h.b16 %v275
    %v938 = vunpack.c.l.b16 %v276
    %v939 = vunpack.c.l.b16 %v277
    %v940 = vunpack.c.h.b16 %v277
    %v941 = vunpack.c.l.b16 %v278
    %v942 = vunpack.c.l.b16 %v279
    %v943 = vunpack.c.h.b16 %v279
    %v944 = vunpack.c.l.b16 %v280
    %v945 = vunpack.c.l.b16 %v281
    %v946 = vunpack.c.h.b16 %v281
    %v947 = vunpack.c.l.b16 %v282
    %v948 = vunpack.c.l.b16 %v283
    %v949 = vunpack.c.h.b16 %v283
    %v950 = vunpack.c.l.b16 %v284
    %v951 = vunpack.c.l.b16 %v285
    %v952 = vunpack.c.h.b16 %v285
    %v953 = vunpack.c.l.b16 %v286
    %v954 = vunpack.c.l.b16 %v287
    %v955 = vunpack.c.h.b16 %v287
    %v956 = vunpack.c.l.b16 %v288
    %v957 = vunpack.c.l.b16 %v289
    %v958 = vunpack.c.h.b16 %v289
    %v959 = vunpack.c.l.b16 %v290
    %v960 = vunpack.c.l.b16 %v291
    %v961 = vunpack.c.h.b16 %v291
    %v962 = vunpack.c.l.b16 %v292
    %v963 = vunpack.c.l.b16 %v293
    %v964 = vunpack.c.h.b16 %v293
    %v965 = vunpack.c.l.b16 %v294
    %v966 = vunpack.c.l.b16 %v295
    %v967 = vunpack.c.h.b16 %v295
    %v968 = vunpack.c.l.b16 %v296
    %v969 = vunpack.c.l.b16 %v297
    %v970 = vunpack.c.h.b16 %v297
    %v971 = vunpack.c.l.b16 %v298
    %v972 = vunpack.c.l.b16 %v299
    %v973 = vunpack.c.h.b16 %v299
    %v974 = vunpack.c.l.b16 %v300
    %v975 = vunpack.c.l.b16 %v301
    %v976 = vunpack.c.h.b16 %v301
    %v977 = vunpack.c.l.b16 %v302
    %v978 = vunpack.c.l.b16 %v303
    %v979 = vunpack.c.h.b16 %v303
    %v980 = vunpack.c.l.b16 %v304
    %v981 = vunpack.c.l.b16 %v305
    %v982 = vunpack.c.h.b16 %v305
    %v983 = vunpack.c.l.b16 %v306
    %v984 = vunpack.c.l.b16 %v307
    %v985 = vunpack.c.h.b16 %v307
    %v986 = vunpack.c.l.b16 %v308
    %v987 = vunpack.c.l.b16 %v309
    %v988 = vunpack.c.h.b16 %v309
    %v989 = vunpack.c.l.b16 %v310
    %v990 = vunpack.c.l.b16 %v311
    %v991 = vunpack.c.h.b16 %v311
    %v992 = vunpack.c.l.b16 %v312
    %v993 = vunpack.c.l.b16 %v313
    %v994 = vunpack.c.h.b16 %v313
    %v995 = vunpack.c.l.b16 %v314
    %v996 = vunpack.c.l.b16 %v315
    %v997 = vunpack.c.h.b16 %v315
    %v998 = vunpack.c.l.b16 %v316
    %v999 = vunpack.c.l.b16 %v317
    %v1000 = vunpack.c.h.b16 %v317
    %v1001 = vunpack.c.l.b16 %v318
    %v1002 = vunpack.c.l.b16 %v319
    %v1003 = vunpack.c.h.b16 %v319
    %v1004 = vunpack.c.l.b16 %v320
    %v1005 = vunpack.c.l.b16 %v321
    %v1006 = vunpack.c.h.b16 %v321
    %v1007 = vunpack.c.l.b16 %v322
    %v1008 = vunpack.c.l.b16 %v323
    %v1009 = vunpack.c.h.b16 %v323
    %v1010 = vunpack.c.l.b16 %v324
    %v1011 = vunpack.c.l.b16 %v325
    %v1012 = vunpack.c.h.b16 %v325
    %v1013 = vunpack.c.l.b16 %v326
    %v1014 = vunpack.c.l.b16 %v327
    %v1015 = vunpack.c.h.b16 %v327
    %v1016 = vunpack.c.l.b16 %v328
    %v1017 = vunpack.c.l.b16 %v329
    %v1018 = vunpack.c.h.b16 %v329
    %v1019 = vunpack.c.l.b16 %v330
    %v1020 = vunpack.c.l.b16 %v331
    %v1021 = vunpack.c.h.b16 %v331
    %v1022 = vunpack.c.l.b16 %v332
    %v1023 = vunpack.c.l.b16 %v333
    %v1024 = vunpack.c.h.b16 %v333
    %v1025 = vunpack.c.l.b16 %v334
    %v1026 = vunpack.c.l.b16 %v335
    %v1027 = vunpack.c.h.b16 %v335
    %v1028 = vunpack.c.l.b16 %v336
    %v1029 = vunpack.c.l.b16 %v337
    %v1030 = vunpack.c.h.b16 %v337
    %v1031 = vunpack.c.l.b16 %v338
    %v1032 = vunpack.c.l.b16 %v339
    %v1033 = vunpack.c.h.b16 %v339
    %v1034 = vunpack.c.l.b16 %v340
    %v1035 = vunpack.c.l.b16 %v341
    %v1036 = vunpack.c.h.b16 %v341
    %v1037 = vunpack.c.l.b16 %v342
    %v1038 = vunpack.c.l.b16 %v343
    %v1039 = vunpack.c.h.b16 %v343
    %v1040 = vunpack.c.l.b16 %v344
    %v1041 = vunpack.c.l.b16 %v345
    %v1042 = vunpack.c.h.b16 %v345
    %v1043 = vunpack.c.l.b16 %v346
    %v1044 = vpack.c.b16 %v663, %v660
    %v1045 = vpack.c.b16 %v664, %v661
    %v1046 = vpack.c.b16 %v665, %v662
    %v1047 = vpack.c.b16 %v669, %v666
    %v1048 = vpack.c.b16 %v670, %v667
    %v1049 = vpack.c.b16 %v671, %v668
    %v1050 = vpack.c.b16 %v675, %v672
    %v1051 = vpack.c.b16 %v676, %v673
    %v1052 = vpack.c.b16 %v677, %v674
    %v1053 = vpack.c.b16 %v681, %v678
    %v1054 = vpack.c.b16 %v682, %v679
    %v1055 = vpack.c.b16 %v683, %v680
    %v1056 = vpack.c.b16 %v687, %v684
    %v1057 = vpack.c.b16 %v688, %v685
    %v1058 = vpack.c.b16 %v689, %v686
    %v1059 = vpack.c.b16 %v693, %v690
    %v1060 = vpack.c.b16 %v694, %v691
    %v1061 = vpack.c.b16 %v695, %v692
    %v1062 = vpack.c.b16 %v699, %v696
    %v1063 = vpack.c.b16 %v700, %v697
    %v1064 = vpack.c.b16 %v701, %v698
    %v1065 = vpack.c.b16 %v705, %v702
    %v1066 = vpack.c.b16 %v706, %v703
    %v1067 = vpack.c.b16 %v707, %v704
    %v1068 = vpack.c.b16 %v711, %v708
    %v1069 = vpack.c.b16 %v712, %v709
    %v1070 = vpack.c.b16 %v713, %v710
    %v1071 = vpack.c.b16 %v717, %v714
    %v1072 = vpack.c.b16 %v718, %v715
    %v1073 = vpack.c.b16 %v719, %v716
    %v1074 = vpack.c.b16 %v723, %v720
    %v1075 = vpack.c.b16 %v724, %v721
    %v1076 = vpack.c.b16 %v725, %v722
    %v1077 = vpack.c.b16 %v729, %v726
    %v1078 = vpack.c.b16 %v730, %v727
    %v1079 = vpack.c.b16 %v731, %v728
    %v1080 = vpack.c.b16 %v735, %v732
    %v1081 = vpack.c.b16 %v736, %v733
    %v1082 = vpack.c.b16 %v737, %v734
    %v1083 = vpack.c.b16 %v741, %v738
    %v1084 = vpack.c.b16 %v742, %v739
    %v1085 = vpack.c.b16 %v743, %v740
    %v1086 = vpack.c.b16 %v747, %v744
    %v1087 = vpack.c.b16 %v748, %v745
    %v1088 = vpack.c.b16 %v749, %v746
    %v1089 = vpack.c.b16 %v753, %v750
    %v1090 = vpack.c.b16 %v754, %v751
    %v1091 = vpack.c.b16 %v755, %v752
    %v1092 = vpack.c.b16 %v759, %v756
    %v1093 = vpack.c.b16 %v760, %v757
    %v1094 = vpack.c.b16 %v761, %v758
    %v1095 = vpack.c.b16 %v765, %v762
    %v1096 = vpack.c.b16 %v766, %v763
    %v1097 = vpack.c.b16 %v767, %v764
    %v1098 = vpack.c.b16 %v771, %v768
    %v1099 = vpack.c.b16 %v772, %v769
    %v1100 = vpack.c.b16 %v773, %v770
    %v1101 = vpack.c.b16 %v777, %v774
    %v1102 = vpack.c.b16 %v778, %v775
    %v1103 = vpack.c.b16 %v779, %v776
    %v1104 = vpack.c.b16 %v783, %v780
    %v1105 = vpack.c.b16 %v784, %v781
    %v1106 = vpack.c.b16 %v785, %v782
    %v1107 = vpack.c.b16 %v789, %v786
    %v1108 = vpack.c.b16 %v790, %v787
    %v1109 = vpack.c.b16 %v791, %v788
    %v1110 = vpack.c.b16 %v795, %v792
    %v1111 = vpack.c.b16 %v796, %v793
    %v1112 = vpack.c.b16 %v797, %v794
    %v1113 = vpack.c.b16 %v801, %v798
    %v1114 = vpack.c.b16 %v802, %v799
    %v1115 = vpack.c.b16 %v803, %v800
    %v1116 = vpack.c.b16 %v807, %v804
    %v1117 = vpack.c.b16 %v808, %v805
    %v1118 = vpack.c.b16 %v809, %v806
    %v1119 = vpack.c.b16 %v813, %v810
    %v1120 = vpack.c.b16 %v814, %v811
    %v1121 = vpack.c.b16 %v815, %v812
    %v1122 = vpack.c.b16 %v819, %v816
    %v1123 = vpack.c.b16 %v820, %v817
    %v1124 = vpack.c.b16 %v821, %v818
    %v1125 = vpack.c.b16 %v825, %v822
    %v1126 = vpack.c.b16 %v826, %v823
    %v1127 = vpack.c.b16 %v827, %v824
    %v1128 = vpack.c.b16 %v831, %v828
    %v1129 = vpack.c.b16 %v832, %v829
    %v1130 = vpack.c.b16 %v833, %v830
    %v1131 = vpack.c.b16 %v837, %v834
    %v1132 = vpack.c.b16 %v838, %v835
    %v1133 = vpack.c.b16 %v839, %v836
    %v1134 = vpack.c.b16 %v843, %v840
    %v1135 = vpack.c.b16 %v844, %v841
    %v1136 = vpack.c.b16 %v845, %v842
    %v1137 = vpack.c.b16 %v849, %v846
    %v1138 = vpack.c.b16 %v850, %v847
    %v1139 = vpack.c.b16 %v851, %v848
    %v1140 = vpack.c.b16 %v855, %v852
    %v1141 = vpack.c.b16 %v856, %v853
    %v1142 = vpack.c.b16 %v857, %v854
    %v1143 = vpack.c.b16 %v861, %v858
    %v1144 = vpack.c.b16 %v862, %v859
    %v1145 = vpack.c.b16 %v863, %v860
    %v1146 = vpack.c.b16 %v867, %v864
    %v1147 = vpack.c.b16 %v868, %v865
    %v1148 = vpack.c.b16 %v869, %v866
    %v1149 = vpack.c.b16 %v873, %v870
    %v1150 = vpack.c.b16 %v874, %v871
    %v1151 = vpack.c.b16 %v875, %v872
    %v1152 = vpack.c.b16 %v879, %v876
    %v1153 = vpack.c.b16 %v880, %v877
    %v1154 = vpack.c.b16 %v881, %v878
    %v1155 = vpack.c.b16 %v885, %v882
    %v1156 = vpack.c.b16 %v886, %v883
    %v1157 = vpack.c.b16 %v887, %v884
    %v1158 = vpack.c.b16 %v891, %v888
    %v1159 = vpack.c.b16 %v892, %v889
    %v1160 = vpack.c.b16 %v893, %v890
    %v1161 = vpack.c.b16 %v897, %v894
    %v1162 = vpack.c.b16 %v898, %v895
    %v1163 = vpack.c.b16 %v899, %v896
    %v1164 = vpack.c.b16 %v903, %v900
    %v1165 = vpack.c.b16 %v904, %v901
    %v1166 = vpack.c.b16 %v905, %v902
    %v1167 = vpack.c.b16 %v909, %v906
    %v1168 = vpack.c.b16 %v910, %v907
    %v1169 = vpack.c.b16 %v911, %v908
    %v1170 = vpack.c.b16 %v915, %v912
    %v1171 = vpack.c.b16 %v916, %v913
    %v1172 = vpack.c.b16 %v917, %v914
    %v1173 = vpack.c.b16 %v921, %v918
    %v1174 = vpack.c.b16 %v922, %v919
    %v1175 = vpack.c.b16 %v923, %v920
    %v1176 = vpack.c.b16 %v927, %v924
    %v1177 = vpack.c.b16 %v928, %v925
    %v1178 = vpack.c.b16 %v929, %v926
    %v1179 = vpack.c.b16 %v933, %v930
    %v1180 = vpack.c.b16 %v934, %v931
    %v1181 = vpack.c.b16 %v935, %v932
    %v1182 = vpack.c.b16 %v939, %v936
    %v1183 = vpack.c.b16 %v940, %v937
    %v1184 = vpack.c.b16 %v941, %v938
    %v1185 = vpack.c.b16 %v945, %v942
    %v1186 = vpack.c.b16 %v946, %v943
    %v1187 = vpack.c.b16 %v947, %v944
    %v1188 = vpack.c.b16 %v951, %v948
    %v1189 = vpack.c.b16 %v952, %v949
    %v1190 = vpack.c.b16 %v953, %v950
    %v1191 = vpack.c.b16 %v957, %v954
    %v1192 = vpack.c.b16 %v958, %v955
    %v1193 = vpack.c.b16 %v959, %v956
    %v1194 = vpack.c.b16 %v963, %v960
    %v1195 = vpack.c.b16 %v964, %v961
    %v1196 = vpack.c.b16 %v965, %v962
    %v1197 = vpack.c.b16 %v969, %v966
    %v1198 = vpack.c.b16 %v970, %v967
    %v1199 = vpack.c.b16 %v971, %v968
    %v1200 = vpack.c.b16 %v975, %v972
    %v1201 = vpack.c.b16 %v976, %v973
    %v1202 = vpack.c.b16 %v977, %v974
    %v1203 = vpack.c.b16 %v981, %v978
    %v1204 = vpack.c.b16 %v982, %v979
    %v1205 = vpack.c.b16 %v983, %v980
    %v1206 = vpack.c.b16 %v987, %v984
    %v1207 = vpack.c.b16 %v988, %v985
    %v1208 = vpack.c.b16 %v989, %v986
    %v1209 = vpack.c.b16 %v993, %v990
    %v1210 = vpack.c.b16 %v994, %v991
    %v1211 = vpack.c.b16 %v995, %v992
    %v1212 = vpack.c.b16 %v999, %v996
    %v1213 = vpack.c.b16 %v1000, %v997
    %v1214 = vpack.c.b16 %v1001, %v998
    %v1215 = vpack.c.b16 %v1005, %v1002
    %v1216 = vpack.c.b16 %v1006, %v1003
    %v1217 = vpack.c.b16 %v1007, %v1004
    %v1218 = vpack.c.b16 %v1011, %v1008
    %v1219 = vpack.c.b16 %v1012, %v1009
    %v1220 = vpack.c.b16 %v1013, %v1010
    %v1221 = vpack.c.b16 %v1017, %v1014
    %v1222 = vpack.c.b16 %v1018, %v1015
    %v1223 = vpack.c.b16 %v1019, %v1016
    %v1224 = vpack.c.b16 %v1023, %v1020
    %v1225 = vpack.c.b16 %v1024, %v1021
    %v1226 = vpack.c.b16 %v1025, %v1022
    %v1227 = vpack.c.b16 %v1029, %v1026
    %v1228 = vpack.c.b16 %v1030, %v1027
    %v1229 = vpack.c.b16 %v1031, %v1028
    %v1230 = vpack.c.b16 %v1035, %v1032
    %v1231 = vpack.c.b16 %v1036, %v1033
    %v1232 = vpack.c.b16 %v1037, %v1034
    %v1233 = vpack.c.b16 %v1041, %v1038
    %v1234 = vpack.c.b16 %v1042, %v1039
    %v1235 = vpack.c.b16 %v1043, %v1040
    %1428 = vmatprep.subr.bf16.mxu0 %v1045
    %1429 = vmatpush1.bf16.msra.mxu0 %v1044
    %1430 = vmatprep.subr.bf16.mxu0 %v1048
    %1431 = vmatpush1.bf16.msra.mxu0 %v1047
    %1432 = vmatprep.subr.bf16.mxu0 %v1051
    %1433 = vmatpush1.bf16.msra.mxu0 %v1050
    %1434 = vmatprep.subr.bf16.mxu0 %v1054
    %1435 = vmatpush1.bf16.msra.mxu0 %v1053
    %1436 = vmatprep.subr.bf16.mxu0 %v1057
    %1437 = vmatpush1.bf16.msra.mxu0 %v1056
    %1438 = vmatprep.subr.bf16.mxu0 %v1060
    %1439 = vmatpush1.bf16.msra.mxu0 %v1059
    %1440 = vmatprep.subr.bf16.mxu0 %v1063
    %1441 = vmatpush1.bf16.msra.mxu0 %v1062
    %1442 = vmatprep.subr.bf16.mxu0 %v1066
    %1443 = vmatpush1.bf16.msra.mxu0 %v1065
    %1444 = vmatprep.subr.bf16.mxu0 %v1069
    %1445 = vmatpush1.bf16.msra.mxu0 %v1068
    %1446 = vmatprep.subr.bf16.mxu0 %v1072
    %1447 = vmatpush1.bf16.msra.mxu0 %v1071
    %1448 = vmatprep.subr.bf16.mxu0 %v1075
    %1449 = vmatpush1.bf16.msra.mxu0 %v1074
    %1450 = vmatprep.subr.bf16.mxu0 %v1078
    %1451 = vmatpush1.bf16.msra.mxu0 %v1077
    %1452 = vmatprep.subr.bf16.mxu0 %v1081
    %1453 = vmatpush1.bf16.msra.mxu0 %v1080
    %1454 = vmatprep.subr.bf16.mxu0 %v1084
    %1455 = vmatpush1.bf16.msra.mxu0 %v1083
    %1456 = vmatprep.subr.bf16.mxu0 %v1087
    %1457 = vmatpush1.bf16.msra.mxu0 %v1086
    %1458 = vmatprep.subr.bf16.mxu0 %v1090
    %1459 = vmatpush1.bf16.msra.mxu0 %v1089
    %1460 = vmatprep.mubr.bf16.mxu0 %v389
    %1461 = vmatmul.mubr.bf16.gmra.mrb[0].mxu0 %v388
    %v1462 = vpop.f32.mrb[0].mxu0
    %v1463 = vadd.f32 %v352, %v1462
    %v1464 = vpop.f32.mrb[0].mxu0
    %v1465 = vadd.f32 %v356, %v1464
    %v1466 = vpop.f32.mrb[0].mxu0
    %v1467 = vadd.f32 %v352, %v1466
    %v1468 = vpop.f32.mrb[0].mxu0
    %v1469 = vadd.f32 %v356, %v1468
    %1470 = vdwg.mxu0
    %1471 = vmatprep.subr.bf16.mxu0 %v1093
    %1472 = vmatpush1.bf16.msra.mxu0 %v1092
    %1473 = vmatprep.subr.bf16.mxu0 %v1096
    %1474 = vmatpush1.bf16.msra.mxu0 %v1095
    %1475 = vmatprep.subr.bf16.mxu0 %v1099
    %1476 = vmatpush1.bf16.msra.mxu0 %v1098
    %1477 = vmatprep.subr.bf16.mxu0 %v1102
    %1478 = vmatpush1.bf16.msra.mxu0 %v1101
    %1479 = vmatprep.subr.bf16.mxu0 %v1105
    %1480 = vmatpush1.bf16.msra.mxu0 %v1104
    %1481 = vmatprep.subr.bf16.mxu0 %v1108
    %1482 = vmatpush1.bf16.msra.mxu0 %v1107
    %1483 = vmatprep.subr.bf16.mxu0 %v1111
    %1484 = vmatpush1.bf16.msra.mxu0 %v1110
    %1485 = vmatprep.subr.bf16.mxu0 %v1114
    %1486 = vmatpush1.bf16.msra.mxu0 %v1113
    %1487 = vmatprep.subr.bf16.mxu0 %v1117
    %1488 = vmatpush1.bf16.msra.mxu0 %v1116
    %1489 = vmatprep.subr.bf16.mxu0 %v1120
    %1490 = vmatpush1.bf16.msra.mxu0 %v1119
    %1491 = vmatprep.subr.bf16.mxu0 %v1123
    %1492 = vmatpush1.bf16.msra.mxu0 %v1122
    %1493 = vmatprep.subr.bf16.mxu0 %v1126
    %1494 = vmatpush1.bf16.msra.mxu0 %v1125
    %1495 = vmatprep.subr.bf16.mxu0 %v1129
    %1496 = vmatpush1.bf16.msra.mxu0 %v1128
    %1497 = vmatprep.subr.bf16.mxu0 %v1132
    %1498 = vmatpush1.bf16.msra.mxu0 %v1131
    %1499 = vmatprep.subr.bf16.mxu0 %v1135
    %1500 = vmatpush1.bf16.msra.mxu0 %v1134
    %1501 = vmatprep.subr.bf16.mxu0 %v1138
    %1502 = vmatpush1.bf16.msra.mxu0 %v1137
    %1503 = vmatprep.mubr.bf16.mxu0 %v391
    %1504 = vmatmul.mubr.bf16.gmra.mrb[0].mxu0 %v390
    %v1505 = vpop.f32.mrb[0].mxu0
    %v1506 = vadd.f32 %v1463, %v1505
    %v1507 = vpop.f32.mrb[0].mxu0
    %v1508 = vadd.f32 %v1465, %v1507
    %v1509 = vpop.f32.mrb[0].mxu0
    %v1510 = vadd.f32 %v1467, %v1509
    %v1511 = vpop.f32.mrb[0].mxu0
    %v1512 = vadd.f32 %v1469, %v1511
    %1513 = vdwg.mxu0
    %1514 = vmatprep.subr.bf16.mxu0 %v1141
    %1515 = vmatpush1.bf16.msra.mxu0 %v1140
    %1516 = vmatprep.subr.bf16.mxu0 %v1144
    %1517 = vmatpush1.bf16.msra.mxu0 %v1143
    %1518 = vmatprep.subr.bf16.mxu0 %v1147
    %1519 = vmatpush1.bf16.msra.mxu0 %v1146
    %1520 = vmatprep.subr.bf16.mxu0 %v1150
    %1521 = vmatpush1.bf16.msra.mxu0 %v1149
    %1522 = vmatprep.subr.bf16.mxu0 %v1153
    %1523 = vmatpush1.bf16.msra.mxu0 %v1152
    %1524 = vmatprep.subr.bf16.mxu0 %v1156
    %1525 = vmatpush1.bf16.msra.mxu0 %v1155
    %1526 = vmatprep.subr.bf16.mxu0 %v1159
    %1527 = vmatpush1.bf16.msra.mxu0 %v1158
    %1528 = vmatprep.subr.bf16.mxu0 %v1162
    %1529 = vmatpush1.bf16.msra.mxu0 %v1161
    %1530 = vmatprep.subr.bf16.mxu0 %v1165
    %1531 = vmatpush1.bf16.msra.mxu0 %v1164
    %1532 = vmatprep.subr.bf16.mxu0 %v1168
    %1533 = vmatpush1.bf16.msra.mxu0 %v1167
    %1534 = vmatprep.subr.bf16.mxu0 %v1171
    %1535 = vmatpush1.bf16.msra.mxu0 %v1170
    %1536 = vmatprep.subr.bf16.mxu0 %v1174
    %1537 = vmatpush1.bf16.msra.mxu0 %v1173
    %1538 = vmatprep.subr.bf16.mxu0 %v1177
    %1539 = vmatpush1.bf16.msra.mxu0 %v1176
    %1540 = vmatprep.subr.bf16.mxu0 %v1180
    %1541 = vmatpush1.bf16.msra.mxu0 %v1179
    %1542 = vmatprep.subr.bf16.mxu0 %v1183
    %1543 = vmatpush1.bf16.msra.mxu0 %v1182
    %1544 = vmatprep.subr.bf16.mxu0 %v1186
    %1545 = vmatpush1.bf16.msra.mxu0 %v1185
    %1546 = vmatprep.mubr.bf16.mxu0 %v393
    %1547 = vmatmul.mubr.bf16.gmra.mrb[0].mxu0 %v392
    %v1548 = vpop.f32.mrb[0].mxu0
    %v1549 = vadd.f32 %v1506, %v1548
    %v1550 = vpop.f32.mrb[0].mxu0
    %v1551 = vadd.f32 %v1508, %v1550
    %v1552 = vpop.f32.mrb[0].mxu0
    %v1553 = vadd.f32 %v1510, %v1552
    %v1554 = vpop.f32.mrb[0].mxu0
    %v1555 = vadd.f32 %v1512, %v1554
    %1556 = vdwg.mxu0
    %1557 = vmatprep.subr.bf16.mxu0 %v1189
    %1558 = vmatpush1.bf16.msra.mxu0 %v1188
    %1559 = vmatprep.subr.bf16.mxu0 %v1192
    %1560 = vmatpush1.bf16.msra.mxu0 %v1191
    %1561 = vmatprep.subr.bf16.mxu0 %v1195
    %1562 = vmatpush1.bf16.msra.mxu0 %v1194
    %1563 = vmatprep.subr.bf16.mxu0 %v1198
    %1564 = vmatpush1.bf16.msra.mxu0 %v1197
    %1565 = vmatprep.subr.bf16.mxu0 %v1201
    %1566 = vmatpush1.bf16.msra.mxu0 %v1200
    %1567 = vmatprep.subr.bf16.mxu0 %v1204
    %1568 = vmatpush1.bf16.msra.mxu0 %v1203
    %1569 = vmatprep.subr.bf16.mxu0 %v1207
    %1570 = vmatpush1.bf16.msra.mxu0 %v1206
    %1571 = vmatprep.subr.bf16.mxu0 %v1210
    %1572 = vmatpush1.bf16.msra.mxu0 %v1209
    %1573 = vmatprep.subr.bf16.mxu0 %v1213
    %1574 = vmatpush1.bf16.msra.mxu0 %v1212
    %1575 = vmatprep.subr.bf16.mxu0 %v1216
    %1576 = vmatpush1.bf16.msra.mxu0 %v1215
    %1577 = vmatprep.subr.bf16.mxu0 %v1219
    %1578 = vmatpush1.bf16.msra.mxu0 %v1218
    %1579 = vmatprep.subr.bf16.mxu0 %v1222
    %1580 = vmatpush1.bf16.msra.mxu0 %v1221
    %1581 = vmatprep.subr.bf16.mxu0 %v1225
    %1582 = vmatpush1.bf16.msra.mxu0 %v1224
    %1583 = vmatprep.subr.bf16.mxu0 %v1228
    %1584 = vmatpush1.bf16.msra.mxu0 %v1227
    %1585 = vmatprep.subr.bf16.mxu0 %v1231
    %1586 = vmatpush1.bf16.msra.mxu0 %v1230
    %1587 = vmatprep.subr.bf16.mxu0 %v1234
    %1588 = vmatpush1.bf16.msra.mxu0 %v1233
    %1589 = vmatprep.mubr.bf16.mxu0 %v395
    %1590 = vmatmul.mubr.bf16.gmra.mrb[0].mxu0 %v394
    %v1591 = vpop.f32.mrb[0].mxu0
    %v1592 = vadd.f32 %v1549, %v1591
    %v1593 = vpop.f32.mrb[0].mxu0
    %v1594 = vadd.f32 %v1551, %v1593
    %v1595 = vpop.f32.mrb[0].mxu0
    %v1596 = vadd.f32 %v1553, %v1595
    %v1597 = vpop.f32.mrb[0].mxu0
    %v1598 = vadd.f32 %v1555, %v1597
    %1599 = vdwg.mxu0
    %1600 = vmatprep.subr.bf16.mxu0 0
    %1601 = vmatpush1.bf16.msra.mxu0 %v1046
    %1602 = vmatprep.subr.bf16.mxu0 0
    %1603 = vmatpush1.bf16.msra.mxu0 %v1049
    %1604 = vmatprep.subr.bf16.mxu0 0
    %1605 = vmatpush1.bf16.msra.mxu0 %v1052
    %1606 = vmatprep.subr.bf16.mxu0 0
    %1607 = vmatpush1.bf16.msra.mxu0 %v1055
    %1608 = vmatprep.subr.bf16.mxu0 0
    %1609 = vmatpush1.bf16.msra.mxu0 %v1058
    %1610 = vmatprep.subr.bf16.mxu0 0
    %1611 = vmatpush1.bf16.msra.mxu0 %v1061
    %1612 = vmatprep.subr.bf16.mxu0 0
    %1613 = vmatpush1.bf16.msra.mxu0 %v1064
    %1614 = vmatprep.subr.bf16.mxu0 0
    %1615 = vmatpush1.bf16.msra.mxu0 %v1067
    %1616 = vmatprep.subr.bf16.mxu0 0
    %1617 = vmatpush1.bf16.msra.mxu0 %v1070
    %1618 = vmatprep.subr.bf16.mxu0 0
    %1619 = vmatpush1.bf16.msra.mxu0 %v1073
    %1620 = vmatprep.subr.bf16.mxu0 0
    %1621 = vmatpush1.bf16.msra.mxu0 %v1076
    %1622 = vmatprep.subr.bf16.mxu0 0
    %1623 = vmatpush1.bf16.msra.mxu0 %v1079
    %1624 = vmatprep.subr.bf16.mxu0 0
    %1625 = vmatpush1.bf16.msra.mxu0 %v1082
    %1626 = vmatprep.subr.bf16.mxu0 0
    %1627 = vmatpush1.bf16.msra.mxu0 %v1085
    %1628 = vmatprep.subr.bf16.mxu0 0
    %1629 = vmatpush1.bf16.msra.mxu0 %v1088
    %1630 = vmatprep.subr.bf16.mxu0 0
    %1631 = vmatpush1.bf16.msra.mxu0 %v1091
    %1632 = vmatprep.mubr.bf16.mxu0 %v389
    %1633 = vmatmul.mubr.bf16.gmra.mrb[0].mxu0 %v388
    %v1634 = vpop.f32.mrb[0].mxu0
    %v1635 = vadd.f32 %v360, %v1634
    %v1636 = vpop.f32.mrb[0].mxu0
    %v1637 = vpop.f32.mrb[0].mxu0
    %v1638 = vadd.f32 %v360, %v1637
    %v1639 = vpop.f32.mrb[0].mxu0
    %1640 = vdwg.mxu0
    %1641 = vmatprep.subr.bf16.mxu0 0
    %1642 = vmatpush1.bf16.msra.mxu0 %v1094
    %1643 = vmatprep.subr.bf16.mxu0 0
    %1644 = vmatpush1.bf16.msra.mxu0 %v1097
    %1645 = vmatprep.subr.bf16.mxu0 0
    %1646 = vmatpush1.bf16.msra.mxu0 %v1100
    %1647 = vmatprep.subr.bf16.mxu0 0
    %1648 = vmatpush1.bf16.msra.mxu0 %v1103
    %1649 = vmatprep.subr.bf16.mxu0 0
    %1650 = vmatpush1.bf16.msra.mxu0 %v1106
    %1651 = vmatprep.subr.bf16.mxu0 0
    %1652 = vmatpush1.bf16.msra.mxu0 %v1109
    %1653 = vmatprep.subr.bf16.mxu0 0
    %1654 = vmatpush1.bf16.msra.mxu0 %v1112
    %1655 = vmatprep.subr.bf16.mxu0 0
    %1656 = vmatpush1.bf16.msra.mxu0 %v1115
    %1657 = vmatprep.subr.bf16.mxu0 0
    %1658 = vmatpush1.bf16.msra.mxu0 %v1118
    %1659 = vmatprep.subr.bf16.mxu0 0
    %1660 = vmatpush1.bf16.msra.mxu0 %v1121
    %1661 = vmatprep.subr.bf16.mxu0 0
    %1662 = vmatpush1.bf16.msra.mxu0 %v1124
    %1663 = vmatprep.subr.bf16.mxu0 0
    %1664 = vmatpush1.bf16.msra.mxu0 %v1127
    %1665 = vmatprep.subr.bf16.mxu0 0
    %1666 = vmatpush1.bf16.msra.mxu0 %v1130
    %1667 = vmatprep.subr.bf16.mxu0 0
    %1668 = vmatpush1.bf16.msra.mxu0 %v1133
    %1669 = vmatprep.subr.bf16.mxu0 0
    %1670 = vmatpush1.bf16.msra.mxu0 %v1136
    %1671 = vmatprep.subr.bf16.mxu0 0
    %1672 = vmatpush1.bf16.msra.mxu0 %v1139
    %1673 = vmatprep.mubr.bf16.mxu0 %v391
    %1674 = vmatmul.mubr.bf16.gmra.mrb[0].mxu0 %v390
    %v1675 = vpop.f32.mrb[0].mxu0
    %v1676 = vadd.f32 %v1635, %v1675
    %v1677 = vpop.f32.mrb[0].mxu0
    %v1678 = vpop.f32.mrb[0].mxu0
    %v1679 = vadd.f32 %v1638, %v1678
    %v1680 = vpop.f32.mrb[0].mxu0
    %1681 = vdwg.mxu0
    %1682 = vmatprep.subr.bf16.mxu0 0
    %1683 = vmatpush1.bf16.msra.mxu0 %v1142
    %1684 = vmatprep.subr.bf16.mxu0 0
    %1685 = vmatpush1.bf16.msra.mxu0 %v1145
    %1686 = vmatprep.subr.bf16.mxu0 0
    %1687 = vmatpush1.bf16.msra.mxu0 %v1148
    %1688 = vmatprep.subr.bf16.mxu0 0
    %1689 = vmatpush1.bf16.msra.mxu0 %v1151
    %1690 = vmatprep.subr.bf16.mxu0 0
    %1691 = vmatpush1.bf16.msra.mxu0 %v1154
    %1692 = vmatprep.subr.bf16.mxu0 0
    %1693 = vmatpush1.bf16.msra.mxu0 %v1157
    %1694 = vmatprep.subr.bf16.mxu0 0
    %1695 = vmatpush1.bf16.msra.mxu0 %v1160
    %1696 = vmatprep.subr.bf16.mxu0 0
    %1697 = vmatpush1.bf16.msra.mxu0 %v1163
    %1698 = vmatprep.subr.bf16.mxu0 0
    %1699 = vmatpush1.bf16.msra.mxu0 %v1166
    %1700 = vmatprep.subr.bf16.mxu0 0
    %1701 = vmatpush1.bf16.msra.mxu0 %v1169
    %1702 = vmatprep.subr.bf16.mxu0 0
    %1703 = vmatpush1.bf16.msra.mxu0 %v1172
    %1704 = vmatprep.subr.bf16.mxu0 0
    %1705 = vmatpush1.bf16.msra.mxu0 %v1175
    %1706 = vmatprep.subr.bf16.mxu0 0
    %1707 = vmatpush1.bf16.msra.mxu0 %v1178
    %1708 = vmatprep.subr.bf16.mxu0 0
    %1709 = vmatpush1.bf16.msra.mxu0 %v1181
    %1710 = vmatprep.subr.bf16.mxu0 0
    %1711 = vmatpush1.bf16.msra.mxu0 %v1184
    %1712 = vmatprep.subr.bf16.mxu0 0
    %1713 = vmatpush1.bf16.msra.mxu0 %v1187
    %1714 = vmatprep.mubr.bf16.mxu0 %v393
    %1715 = vmatmul.mubr.bf16.gmra.mrb[0].mxu0 %v392
    %v1716 = vpop.f32.mrb[0].mxu0
    %v1717 = vadd.f32 %v1676, %v1716
    %v1718 = vpop.f32.mrb[0].mxu0
    %v1719 = vpop.f32.mrb[0].mxu0
    %v1720 = vadd.f32 %v1679, %v1719
    %v1721 = vpop.f32.mrb[0].mxu0
    %1722 = vdwg.mxu0
    %1723 = vmatprep.subr.bf16.mxu0 0
    %1724 = vmatpush1.bf16.msra.mxu0 %v1190
    %1725 = vmatprep.subr.bf16.mxu0 0
    %1726 = vmatpush1.bf16.msra.mxu0 %v1193
    %1727 = vmatprep.subr.bf16.mxu0 0
    %1728 = vmatpush1.bf16.msra.mxu0 %v1196
    %1729 = vmatprep.subr.bf16.mxu0 0
    %1730 = vmatpush1.bf16.msra.mxu0 %v1199
    %1731 = vmatprep.subr.bf16.mxu0 0
    %1732 = vmatpush1.bf16.msra.mxu0 %v1202
    %1733 = vmatprep.subr.bf16.mxu0 0
    %1734 = vmatpush1.bf16.msra.mxu0 %v1205
    %1735 = vmatprep.subr.bf16.mxu0 0
    %1736 = vmatpush1.bf16.msra.mxu0 %v1208
    %1737 = vmatprep.subr.bf16.mxu0 0
    %1738 = vmatpush1.bf16.msra.mxu0 %v1211
    %1739 = vmatprep.subr.bf16.mxu0 0
    %1740 = vmatpush1.bf16.msra.mxu0 %v1214
    %1741 = vmatprep.subr.bf16.mxu0 0
    %1742 = vmatpush1.bf16.msra.mxu0 %v1217
    %1743 = vmatprep.subr.bf16.mxu0 0
    %1744 = vmatpush1.bf16.msra.mxu0 %v1220
    %1745 = vmatprep.subr.bf16.mxu0 0
    %1746 = vmatpush1.bf16.msra.mxu0 %v1223
    %1747 = vmatprep.subr.bf16.mxu0 0
    %1748 = vmatpush1.bf16.msra.mxu0 %v1226
    %1749 = vmatprep.subr.bf16.mxu0 0
    %1750 = vmatpush1.bf16.msra.mxu0 %v1229
    %1751 = vmatprep.subr.bf16.mxu0 0
    %1752 = vmatpush1.bf16.msra.mxu0 %v1232
    %1753 = vmatprep.subr.bf16.mxu0 0
    %1754 = vmatpush1.bf16.msra.mxu0 %v1235
    %1755 = vmatprep.mubr.bf16.mxu0 %v395
    %1756 = vmatmul.mubr.bf16.gmra.mrb[0].mxu0 %v394
    %v1757 = vpop.f32.mrb[0].mxu0
    %v1758 = vadd.f32 %v1717, %v1757
    %v1759 = vpop.f32.mrb[0].mxu0
    %v1760 = vpop.f32.mrb[0].mxu0
    %v1761 = vadd.f32 %v1720, %v1760
    %v1762 = vpop.f32.mrb[0].mxu0
    %1763 = vdwg.mxu0
    %v1764 = vmax.f32 %v1592, 0.0
    %v1765 = vmax.f32 %v1594, 0.0
    %v1766 = vmax.f32 %v1758, 0.0
    %v1767 = vmax.f32 %v1596, 0.0
    %v1768 = vmax.f32 %v1598, 0.0
    %v1769 = vmax.f32 %v1761, 0.0
    %v1770 = vpack.c.bf16 %v1767, %v1764
    %v1771 = vpack.c.bf16 %v1768, %v1765
    %v1772 = vpack.c.bf16 %v1769, %v1766
    %v1773 = vld [vmem:[#allocation7] sm:$0xf]
    %v1774 = vld [vmem:[#allocation7 + $0x4] sm:$0xf]
    %v1775 = vld [vmem:[#allocation7 + $0x8] sm:$0xf]
    %v1776 = vld [vmem:[#allocation7 + $0xc] sm:$0xf]
    %v1777 = vld [vmem:[#allocation7 + $0x10] sm:$0xf]
    %v1778 = vld [vmem:[#allocation7 + $0x14] sm:$0xf]
    %v1779 = vld [vmem:[#allocation7 + $0x18] sm:$0xf]
    %v1780 = vld [vmem:[#allocation7 + $0x1c] sm:$0xf]
    %v1781 = vld [vmem:[#allocation7 + $0x20] sm:$0xf]
    %v1782 = vld [vmem:[#allocation7 + $0x24] sm:$0xf]
    %v1783 = vld [vmem:[#allocation7 + $0x28] sm:$0xf]
    %v1784 = vld [vmem:[#allocation7 + $0x2c] sm:$0xf]
    %v1785 = vld [vmem:[#allocation7 + $0x30] sm:$0xf]
    %v1786 = vld [vmem:[#allocation7 + $0x34] sm:$0xf]
    %v1787 = vld [vmem:[#allocation7 + $0x38] sm:$0xf]
    %v1788 = vld [vmem:[#allocation7 + $0x3c] sm:$0xf]
    %v1789 = vld [vmem:[#allocation7 + $0x40] sm:$0xf]
    %v1790 = vld [vmem:[#allocation7 + $0x44] sm:$0xf]
    %v1791 = vld [vmem:[#allocation7 + $0x48] sm:$0xf]
    %v1792 = vld [vmem:[#allocation7 + $0x4c] sm:$0xf]
    %v1793 = vld [vmem:[#allocation7 + $0x50] sm:$0xf]
    %v1794 = vld [vmem:[#allocation7 + $0x54] sm:$0xf]
    %v1795 = vld [vmem:[#allocation7 + $0x58] sm:$0xf]
    %v1796 = vld [vmem:[#allocation7 + $0x5c] sm:$0xf]
    %v1797 = vld [vmem:[#allocation7 + $0x60] sm:$0xf]
    %v1798 = vld [vmem:[#allocation7 + $0x64] sm:$0xf]
    %v1799 = vld [vmem:[#allocation7 + $0x68] sm:$0xf]
    %v1800 = vld [vmem:[#allocation7 + $0x6c] sm:$0xf]
    %v1801 = vld [vmem:[#allocation7 + $0x70] sm:$0xf]
    %v1802 = vld [vmem:[#allocation7 + $0x74] sm:$0xf]
    %v1803 = vld [vmem:[#allocation7 + $0x78] sm:$0xf]
    %v1804 = vld [vmem:[#allocation7 + $0x7c] sm:$0xf]
    %v1805 = vld [vmem:[#allocation7 + $0x80] sm:$0xf]
    %v1806 = vld [vmem:[#allocation7 + $0x84] sm:$0xf]
    %v1807 = vld [vmem:[#allocation7 + $0x88] sm:$0xf]
    %v1808 = vld [vmem:[#allocation7 + $0x8c] sm:$0xf]
    %v1809 = vld [vmem:[#allocation7 + $0x90] sm:$0xf]
    %v1810 = vld [vmem:[#allocation7 + $0x94] sm:$0xf]
    %v1811 = vld [vmem:[#allocation7 + $0x98] sm:$0xf]
    %v1812 = vld [vmem:[#allocation7 + $0x9c] sm:$0xf]
    %v1813 = vld [vmem:[#allocation7 + $0xa0] sm:$0xf]
    %v1814 = vld [vmem:[#allocation7 + $0xa4] sm:$0xf]
    %v1815 = vld [vmem:[#allocation7 + $0xa8] sm:$0xf]
    %v1816 = vld [vmem:[#allocation7 + $0xac] sm:$0xf]
    %v1817 = vld [vmem:[#allocation7 + $0xb0] sm:$0xf]
    %v1818 = vld [vmem:[#allocation7 + $0xb4] sm:$0xf]
    %v1819 = vld [vmem:[#allocation7 + $0xb8] sm:$0xf]
    %v1820 = vld [vmem:[#allocation7 + $0xbc] sm:$0xf]
    %v1821 = vld [vmem:[%s4] sm:$0x1]
    %v1823 = vlaneseq
    %v1824 = vshrl.u32 %v1823, 7
    %v1825 = vsub.s32 0, %v1824
    %v1826 = vrot.slane %v1821, %v1825
    %v1876 = vunpack.c.l.b16 %v1773
    %v1877 = vunpack.c.l.b16 %v1774
    %v1878 = vunpack.c.l.b16 %v1775
    %v1879 = vunpack.c.l.b16 %v1776
    %v1880 = vunpack.c.l.b16 %v1777
    %v1881 = vunpack.c.l.b16 %v1778
    %v1882 = vunpack.c.l.b16 %v1779
    %v1883 = vunpack.c.l.b16 %v1780
    %v1884 = vunpack.c.l.b16 %v1781
    %v1885 = vunpack.c.l.b16 %v1782
    %v1886 = vunpack.c.l.b16 %v1783
    %v1887 = vunpack.c.l.b16 %v1784
    %v1888 = vunpack.c.l.b16 %v1785
    %v1889 = vunpack.c.l.b16 %v1786
    %v1890 = vunpack.c.l.b16 %v1787
    %v1891 = vunpack.c.l.b16 %v1788
    %v1892 = vunpack.c.l.b16 %v1789
    %v1893 = vunpack.c.l.b16 %v1790
    %v1894 = vunpack.c.l.b16 %v1791
    %v1895 = vunpack.c.l.b16 %v1792
    %v1896 = vunpack.c.l.b16 %v1793
    %v1897 = vunpack.c.l.b16 %v1794
    %v1898 = vunpack.c.l.b16 %v1795
    %v1899 = vunpack.c.l.b16 %v1796
    %v1900 = vunpack.c.l.b16 %v1797
    %v1901 = vunpack.c.l.b16 %v1798
    %v1902 = vunpack.c.l.b16 %v1799
    %v1903 = vunpack.c.l.b16 %v1800
    %v1904 = vunpack.c.l.b16 %v1801
    %v1905 = vunpack.c.l.b16 %v1802
    %v1906 = vunpack.c.l.b16 %v1803
    %v1907 = vunpack.c.l.b16 %v1804
    %v1908 = vunpack.c.l.b16 %v1805
    %v1909 = vunpack.c.l.b16 %v1806
    %v1910 = vunpack.c.l.b16 %v1807
    %v1911 = vunpack.c.l.b16 %v1808
    %v1912 = vunpack.c.l.b16 %v1809
    %v1913 = vunpack.c.l.b16 %v1810
    %v1914 = vunpack.c.l.b16 %v1811
    %v1915 = vunpack.c.l.b16 %v1812
    %v1916 = vunpack.c.l.b16 %v1813
    %v1917 = vunpack.c.l.b16 %v1814
    %v1918 = vunpack.c.l.b16 %v1815
    %v1919 = vunpack.c.l.b16 %v1816
    %v1920 = vunpack.c.l.b16 %v1817
    %v1921 = vunpack.c.l.b16 %v1818
    %v1922 = vunpack.c.l.b16 %v1819
    %v1923 = vunpack.c.l.b16 %v1820
    %v1924 = vpack.c.b16 %v1877, %v1876
    %v1925 = vpack.c.b16 %v1879, %v1878
    %v1926 = vpack.c.b16 %v1881, %v1880
    %v1927 = vpack.c.b16 %v1883, %v1882
    %v1928 = vpack.c.b16 %v1885, %v1884
    %v1929 = vpack.c.b16 %v1887, %v1886
    %v1930 = vpack.c.b16 %v1889, %v1888
    %v1931 = vpack.c.b16 %v1891, %v1890
    %v1932 = vpack.c.b16 %v1893, %v1892
    %v1933 = vpack.c.b16 %v1895, %v1894
    %v1934 = vpack.c.b16 %v1897, %v1896
    %v1935 = vpack.c.b16 %v1899, %v1898
    %v1936 = vpack.c.b16 %v1901, %v1900
    %v1937 = vpack.c.b16 %v1903, %v1902
    %v1938 = vpack.c.b16 %v1905, %v1904
    %v1939 = vpack.c.b16 %v1907, %v1906
    %v1940 = vpack.c.b16 %v1909, %v1908
    %v1941 = vpack.c.b16 %v1911, %v1910
    %v1942 = vpack.c.b16 %v1913, %v1912
    %v1943 = vpack.c.b16 %v1915, %v1914
    %v1944 = vpack.c.b16 %v1917, %v1916
    %v1945 = vpack.c.b16 %v1919, %v1918
    %v1946 = vpack.c.b16 %v1921, %v1920
    %v1947 = vpack.c.b16 %v1923, %v1922
    %1972 = vmatprep.subr.bf16.mxu0 0
    %1973 = vmatpush1.bf16.msra.mxu0 %v1924
    %1974 = vmatprep.subr.bf16.mxu0 0
    %1975 = vmatpush1.bf16.msra.mxu0 %v1925
    %1976 = vmatprep.subr.bf16.mxu0 0
    %1977 = vmatpush1.bf16.msra.mxu0 %v1926
    %1978 = vmatprep.subr.bf16.mxu0 0
    %1979 = vmatpush1.bf16.msra.mxu0 %v1927
    %1980 = vmatprep.subr.bf16.mxu0 0
    %1981 = vmatpush1.bf16.msra.mxu0 %v1928
    %1982 = vmatprep.subr.bf16.mxu0 0
    %1983 = vmatpush1.bf16.msra.mxu0 %v1929
    %1984 = vmatprep.subr.bf16.mxu0 0
    %1985 = vmatpush1.bf16.msra.mxu0 %v1930
    %1986 = vmatprep.subr.bf16.mxu0 0
    %1987 = vmatpush1.bf16.msra.mxu0 %v1931
    %1988 = vmatprep.subr.bf16.mxu0 0
    %1989 = vmatpush1.bf16.msra.mxu0 %v1932
    %1990 = vmatprep.subr.bf16.mxu0 0
    %1991 = vmatpush1.bf16.msra.mxu0 %v1933
    %1992 = vmatprep.subr.bf16.mxu0 0
    %1993 = vmatpush1.bf16.msra.mxu0 %v1934
    %1994 = vmatprep.subr.bf16.mxu0 0
    %1995 = vmatpush1.bf16.msra.mxu0 %v1935
    %1996 = vmatprep.subr.bf16.mxu0 0
    %1997 = vmatpush1.bf16.msra.mxu0 %v1936
    %1998 = vmatprep.subr.bf16.mxu0 0
    %1999 = vmatpush1.bf16.msra.mxu0 %v1937
    %2000 = vmatprep.subr.bf16.mxu0 0
    %2001 = vmatpush1.bf16.msra.mxu0 %v1938
    %2002 = vmatprep.subr.bf16.mxu0 0
    %2003 = vmatpush1.bf16.msra.mxu0 %v1939
    %2004 = vmatprep.mubr.bf16.mxu0 %v1771
    %2005 = vmatmul.mubr.bf16.gmra.mrb[0].mxu0 %v1770
    %v2006 = vpop.f32.mrb[0].mxu0
    %v2007 = vadd.f32 %v1826, %v2006
    %v2008 = vpop.f32.mrb[0].mxu0
    %v2009 = vpop.f32.mrb[0].mxu0
    %v2010 = vadd.f32 %v1826, %v2009
    %v2011 = vpop.f32.mrb[0].mxu0
    %2012 = vdwg.mxu0
    %2013 = vmatprep.subr.bf16.mxu0 0
    %2014 = vmatpush1.bf16.msra.mxu0 %v1940
    %2015 = vmatprep.subr.bf16.mxu0 0
    %2016 = vmatpush1.bf16.msra.mxu0 %v1941
    %2017 = vmatprep.subr.bf16.mxu0 0
    %2018 = vmatpush1.bf16.msra.mxu0 %v1942
    %2019 = vmatprep.subr.bf16.mxu0 0
    %2020 = vmatpush1.bf16.msra.mxu0 %v1943
    %2021 = vmatprep.subr.bf16.mxu0 0
    %2022 = vmatpush1.bf16.msra.mxu0 %v1944
    %2023 = vmatprep.subr.bf16.mxu0 0
    %2024 = vmatpush1.bf16.msra.mxu0 %v1945
    %2025 = vmatprep.subr.bf16.mxu0 0
    %2026 = vmatpush1.bf16.msra.mxu0 %v1946
    %2027 = vmatprep.subr.bf16.mxu0 0
    %2028 = vmatpush1.bf16.msra.mxu0 %v1947
    %2029 = vmatprep.subr.bf16.mxu0 0
    %2030 = vmatpush1.bf16.msra.mxu0 0
    %2031 = vmatprep.subr.bf16.mxu0 0
    %2032 = vmatpush1.bf16.msra.mxu0 0
    %2033 = vmatprep.subr.bf16.mxu0 0
    %2034 = vmatpush1.bf16.msra.mxu0 0
    %2035 = vmatprep.subr.bf16.mxu0 0
    %2036 = vmatpush1.bf16.msra.mxu0 0
    %2037 = vmatprep.subr.bf16.mxu0 0
    %2038 = vmatpush1.bf16.msra.mxu0 0
    %2039 = vmatprep.subr.bf16.mxu0 0
    %2040 = vmatpush1.bf16.msra.mxu0 0
    %2041 = vmatprep.subr.bf16.mxu0 0
    %2042 = vmatpush1.bf16.msra.mxu0 0
    %2043 = vmatprep.subr.bf16.mxu0 0
    %2044 = vmatpush1.bf16.msra.mxu0 0
    %2045 = vmatprep.mubr.bf16.mxu0 0
    %2046 = vmatmul.mubr.bf16.gmra.mrb[0].mxu0 %v1772
    %v2047 = vpop.f32.mrb[0].mxu0
    %v2048 = vadd.f32 %v2007, %v2047
    %v2049 = vpop.f32.mrb[0].mxu0
    %v2050 = vpop.f32.mrb[0].mxu0
    %v2051 = vadd.f32 %v2010, %v2050
    %v2052 = vpop.f32.mrb[0].mxu0
    %2053 = vdwg.mxu0
    %v2054 = vmax.f32 %v2048, 0.0
    %v2055 = vmax.f32 %v2051, 0.0
    %v2056 = vpack.c.bf16 %v2055, %v2054
    %v2057 = vld [vmem:[#allocation8] sm:$0xf]
    %v2058 = vld [vmem:[#allocation8 + $0x4] sm:$0xf]
    %v2059 = vld [vmem:[#allocation8 + $0x8] sm:$0xf]
    %v2060 = vld [vmem:[#allocation8 + $0xc] sm:$0xf]
    %v2061 = vld [vmem:[#allocation8 + $0x10] sm:$0xf]
    %v2062 = vld [vmem:[#allocation8 + $0x14] sm:$0xf]
    %v2063 = vld [vmem:[#allocation8 + $0x18] sm:$0xf]
    %v2064 = vld [vmem:[#allocation8 + $0x1c] sm:$0xf]
    %v2065 = vld [vmem:[#allocation8 + $0x20] sm:$0xf]
    %v2066 = vld [vmem:[#allocation8 + $0x24] sm:$0xf]
    %v2067 = vld [vmem:[#allocation8 + $0x28] sm:$0xf]
    %v2068 = vld [vmem:[#allocation8 + $0x2c] sm:$0xf]
    %v2069 = vld [vmem:[#allocation8 + $0x30] sm:$0xf]
    %v2070 = vld [vmem:[#allocation8 + $0x34] sm:$0xf]
    %v2071 = vld [vmem:[#allocation8 + $0x38] sm:$0xf]
    %v2072 = vld [vmem:[#allocation8 + $0x3c] sm:$0xf]
    %v2073 = vld [vmem:[%s6] sm:$0x1]
    %v2075 = vlaneseq
    %v2076 = vshrl.u32 %v2075, 7
    %v2077 = vsub.s32 0, %v2076
    %v2078 = vrot.slane %v2073, %v2077
    %v2096 = vunpack.c.l.b16 %v2057
    %v2097 = vunpack.c.l.b16 %v2058
    %v2098 = vunpack.c.l.b16 %v2059
    %v2099 = vunpack.c.l.b16 %v2060
    %v2100 = vunpack.c.l.b16 %v2061
    %v2101 = vunpack.c.l.b16 %v2062
    %v2102 = vunpack.c.l.b16 %v2063
    %v2103 = vunpack.c.l.b16 %v2064
    %v2104 = vunpack.c.l.b16 %v2065
    %v2105 = vunpack.c.l.b16 %v2066
    %v2106 = vunpack.c.l.b16 %v2067
    %v2107 = vunpack.c.l.b16 %v2068
    %v2108 = vunpack.c.l.b16 %v2069
    %v2109 = vunpack.c.l.b16 %v2070
    %v2110 = vunpack.c.l.b16 %v2071
    %v2111 = vunpack.c.l.b16 %v2072
    %v2112 = vpack.c.b16 %v2097, %v2096
    %v2113 = vpack.c.b16 %v2099, %v2098
    %v2114 = vpack.c.b16 %v2101, %v2100
    %v2115 = vpack.c.b16 %v2103, %v2102
    %v2116 = vpack.c.b16 %v2105, %v2104
    %v2117 = vpack.c.b16 %v2107, %v2106
    %v2118 = vpack.c.b16 %v2109, %v2108
    %v2119 = vpack.c.b16 %v2111, %v2110
    %2128 = vmatprep.subr.bf16.mxu0 0
    %2129 = vmatpush1.bf16.msra.mxu0 %v2112
    %2130 = vmatprep.subr.bf16.mxu0 0
    %2131 = vmatpush1.bf16.msra.mxu0 %v2113
    %2132 = vmatprep.subr.bf16.mxu0 0
    %2133 = vmatpush1.bf16.msra.mxu0 %v2114
    %2134 = vmatprep.subr.bf16.mxu0 0
    %2135 = vmatpush1.bf16.msra.mxu0 %v2115
    %2136 = vmatprep.subr.bf16.mxu0 0
    %2137 = vmatpush1.bf16.msra.mxu0 %v2116
    %2138 = vmatprep.subr.bf16.mxu0 0
    %2139 = vmatpush1.bf16.msra.mxu0 %v2117
    %2140 = vmatprep.subr.bf16.mxu0 0
    %2141 = vmatpush1.bf16.msra.mxu0 %v2118
    %2142 = vmatprep.subr.bf16.mxu0 0
    %2143 = vmatpush1.bf16.msra.mxu0 %v2119
    %2144 = vmatprep.subr.bf16.mxu0 0
    %2145 = vmatpush1.bf16.msra.mxu0 0
    %2146 = vmatprep.subr.bf16.mxu0 0
    %2147 = vmatpush1.bf16.msra.mxu0 0
    %2148 = vmatprep.subr.bf16.mxu0 0
    %2149 = vmatpush1.bf16.msra.mxu0 0
    %2150 = vmatprep.subr.bf16.mxu0 0
    %2151 = vmatpush1.bf16.msra.mxu0 0
    %2152 = vmatprep.subr.bf16.mxu0 0
    %2153 = vmatpush1.bf16.msra.mxu0 0
    %2154 = vmatprep.subr.bf16.mxu0 0
    %2155 = vmatpush1.bf16.msra.mxu0 0
    %2156 = vmatprep.subr.bf16.mxu0 0
    %2157 = vmatpush1.bf16.msra.mxu0 0
    %2158 = vmatprep.subr.bf16.mxu0 0
    %2159 = vmatpush1.bf16.msra.mxu0 0
    %2160 = vmatprep.mubr.bf16.mxu0 0
    %2161 = vmatmul.mubr.bf16.gmra.mrb[0].mxu0 %v2056
    %v2162 = vpop.f32.mrb[0].mxu0
    %v2163 = vadd.f32 %v2078, %v2162
    %v2164 = vpop.f32.mrb[0].mxu0
    %v2165 = vpop.f32.mrb[0].mxu0
    %v2166 = vadd.f32 %v2078, %v2165
    %v2167 = vpop.f32.mrb[0].mxu0
    %2168 = vdwg.mxu0
    %2169 = vst [vmem:[#allocation10] sm:$0xff] %v2163
    %2170 = vst [vmem:[#allocation10 + $0x8] sm:$0xff] %v2166
    // Predicated region
    $region46: #{tpu_custom_call.1} parent=1 // pred_check
      _
    $region47: #{tpu_custom_call.1} parent=1 // pred_check_branch
      %2172 = sbr.rel (0) target = $region49
    $region48: #{tpu_custom_call.1} parent=1 // pred_region
      %s2174 = ssub.s32 256, 256
      %2175 = vsyncadd [#allocation4], %s2174
      %s2176 = sshll.u32 [#allocation10], 4
      %s2177 = int_to_ptr.vmem [resolvable:$true] %s2176
      %2182 = dma.vmem_to_hbm [thread:$0]  %s2177, 256, %s7, [#allocation4], 128, 128, 8
    $region49: #{tpu_custom_call.1} parent=1 // pred_fallthru
      _
    // Predicated region
    $region50: #{tpu_custom_call.1} parent=1 // pred_check
      _
    $region51: #{tpu_custom_call.1} parent=1 // pred_check_branch
      %2184 = sbr.rel (0) target = $region53
    $region52: #{tpu_custom_call.1} parent=1 // pred_region
      %2185 = dma.done [#allocation4], 256
    $region53: #{tpu_custom_call.1} parent=1 // pred_fallthru
      _
    %2186 = vsyncpa [#allocation3], 1
    %2187 = vsyncpa [#allocation6], 1
    %2188 = vsyncpa [#allocation9], 1
    %2189 = vsyncpa [#allocation4], 1

</llo_original>
